<compile_context>
chip_gen: v7x
topology: tpu7x:2x2x1
jax: 0.10.0
libtpu: 0.0.40
codegen_flags: <defaults>
</compile_context>

<pallas_src>
import functools

import numpy as np

import jax
import jax.numpy as jnp
from jax.experimental import pallas as pl
from jax.experimental.pallas import tpu as pltpu


# ---------------------------------------------------------------------------
# Kernels
# ---------------------------------------------------------------------------

def _quantize_act_kernel(x_ref, inv_s_ref, qx_ref):
    """Prologue: q_x = round(x * inv_scales), stored once as bf16 (NoDequant)."""
    # inv_s = 1 / max(input_scales / 127, 1e-5) is precomputed at model-load time,
    # so per element this is one f32 multiply + round + narrowing cast.
    qx_ref[...] = jnp.round(
        x_ref[...].astype(jnp.float32) * inv_s_ref[...]
    ).astype(qx_ref.dtype)


def _matmul_bias_kernel(qx_ref, w_ref, b_ref, o_ref, acc_ref):
    """One (M, N, K) grid step: bf16 matmul-accumulate into an f32 VMEM accumulator."""
    k = pl.program_id(2)

    @pl.when(k == 0)
    def _init():
        acc_ref[...] = jnp.zeros_like(acc_ref)

    # q_x is integer-valued in the int8 range -> exact in bf16.  Weight arrives
    # pre-transposed as (K, N) so K is contracted directly (lane-dense output).
    acc_ref[...] += jnp.dot(qx_ref[...], w_ref[...],
                            preferred_element_type=jnp.float32)

    @pl.when(k == pl.num_programs(2) - 1)
    def _finalize():
        o_ref[...] = (acc_ref[...] + b_ref[...].astype(jnp.float32)).astype(o_ref.dtype)


# ---------------------------------------------------------------------------
# One-time (model-load) parameter preparation
# ---------------------------------------------------------------------------

def _round_up(a, m):
    return ((a + m - 1) // m) * m


def prepare_qkvfc1(weight, bias, input_scales, *, tn=512, tk=512):
    """Prepare W8A8Linear_QKVFc1 parameters ONCE (model load), not per forward.

    weight:       (N, K) torch.nn.Linear layout (fp16/fp32)
    bias:         (1, N), (N,) or None
    input_scales: (K,) per-input-channel abs-max calibration scales
    Returns a dict of padded device arrays + static tiling metadata.
    """
    N, K = weight.shape
    tn_e = min(tn, _round_up(N, 128))
    tk_e = min(tk, _round_up(K, 128))
    Np = _round_up(N, tn_e)
    Kp = _round_up(K, tk_e)

    # Pre-transposed bf16 weight (K, N): the matmul kernel contracts K directly and the
    # output slab is lane-dense along N.  Done once here -> zero per-call HBM copies.
    wt = weight.astype(jnp.bfloat16).T
    if (Kp, Np) != (K, N):
        wt = jnp.pad(wt, ((0, Kp - K), (0, Np - N)))

    if bias is None:
        b = jnp.zeros((1, Np), jnp.float32)
    else:
        b = bias.reshape(1, N).astype(jnp.float32)
        if Np != N:
            b = jnp.pad(b, ((0, 0), (0, Np - N)))

    # scales = max(input_scales / 127, 1e-5); hoist clamp + reciprocal here.
    q_max = 2.0 ** (8 - 1) - 1.0
    inv_s = 1.0 / jnp.maximum(input_scales.astype(jnp.float32) / q_max, 1e-5)
    inv_s = inv_s.reshape(1, K)
    if Kp != K:
        inv_s = jnp.pad(inv_s, ((0, 0), (0, Kp - K)))

    return {"wt": wt, "bias": b, "inv_scales": inv_s,
            "n": N, "k": K, "tn": tn_e, "tk": tk_e}


# ---------------------------------------------------------------------------
# Forward
# ---------------------------------------------------------------------------

@functools.partial(jax.jit,
                   static_argnames=("n", "k", "tn", "tk", "tm", "out_dtype"))
def _w8a8_qkvfc1_forward(x, wt, bias, inv_scales, *, n, k, tn, tk, tm, out_dtype):
    lead = x.shape[:-1]
    x2 = x.reshape(-1, k)
    M = x2.shape[0]

    Kp, Np = wt.shape
    tn_e, tk_e = tn, tk
    tm_e = min(tm, _round_up(M, 8))
    Mp = _round_up(M, tm_e)

    # v7x has 2 TensorCores fed by the "parallel" grid axes; if M collapses to a single
    # tile (decode-style calls) make sure N still contributes >= 2 tiles.
    if Mp // tm_e == 1 and Np // tn_e == 1 and Np % 256 == 0:
        tn_e = Np // 2

    if (Mp, Kp) != (M, k):
        x2 = jnp.pad(x2, ((0, Mp - M), (0, Kp - k)))

    out_bytes = np.dtype(out_dtype).itemsize

    # ---- Prologue: quantize activations once, emit bf16 q_x ------------------------
    qx = pl.pallas_call(
        _quantize_act_kernel,
        out_shape=jax.ShapeDtypeStruct((Mp, Kp), jnp.bfloat16),
        grid_spec=pltpu.PrefetchScalarGridSpec(
            num_scalar_prefetch=0,
            grid=(Mp // tm_e, Kp // tk_e),
            in_specs=[
                pl.BlockSpec((tm_e, tk_e), lambda i, j: (i, j)),   # x (f32)
                pl.BlockSpec((1, tk_e),    lambda i, j: (0, j)),   # 1 / scales
            ],
            out_specs=pl.BlockSpec((tm_e, tk_e), lambda i, j: (i, j)),
        ),
        compiler_params=pltpu.CompilerParams(
            dimension_semantics=("parallel", "parallel"),
        ),
        cost_estimate=pl.CostEstimate(
            flops=2 * Mp * Kp,
            transcendentals=0,
            bytes_accessed=Mp * Kp * 4 + Mp * Kp * 2 + Kp * 4,
        ),
    )(x2, inv_scales)

    # ---- Main matmul: bf16 operands, f32 accumulator, bias fused in finalize -------
    vmem_needed = (2 * (tm_e * tk_e * 2)           # q_x tiles, double-buffered (bf16)
                   + 2 * (tk_e * tn_e * 2)         # weight tiles, double-buffered (bf16)
                   + 2 * (tm_e * tn_e * out_bytes) # output tiles, double-buffered
                   + tm_e * tn_e * 4               # f32 accumulator scratch
                   + 2 * (tn_e * 4))               # bias tiles
    vmem_limit = int(min(max(vmem_needed + (8 << 20), 32 << 20), 48 << 20))

    out = pl.pallas_call(
        _matmul_bias_kernel,
        out_shape=jax.ShapeDtypeStruct((Mp, Np), out_dtype),
        grid_spec=pltpu.PrefetchScalarGridSpec(
            num_scalar_prefetch=0,
            grid=(Mp // tm_e, Np // tn_e, Kp // tk_e),
            in_specs=[
                pl.BlockSpec((tm_e, tk_e), lambda i, j, kk: (i, kk)),  # q_x (bf16)
                pl.BlockSpec((tk_e, tn_e), lambda i, j, kk: (kk, j)),  # weight (K, N) bf16
                pl.BlockSpec((1, tn_e),    lambda i, j, kk: (0, j)),   # bias (f32)
            ],
            out_specs=pl.BlockSpec((tm_e, tn_e), lambda i, j, kk: (i, j)),
            scratch_shapes=[pltpu.VMEM((tm_e, tn_e), jnp.float32)],
        ),
        compiler_params=pltpu.CompilerParams(
            dimension_semantics=("parallel", "parallel", "arbitrary"),
            vmem_limit_bytes=vmem_limit,
        ),
        cost_estimate=pl.CostEstimate(
            flops=2 * Mp * Np * Kp,
            transcendentals=0,
            bytes_accessed=Mp * Kp * 2 + Kp * Np * 2 + Mp * Np * out_bytes + Np * 4,
        ),
    )(qx, wt, bias)

    return out[:M, :n].reshape(*lead, n)


def w8a8_linear_qkvfc1(x, params, *, tm=512, out_dtype=None):
    """W8A8Linear_QKVFc1.forward (act_quant='per_channel', quantize_output=False)."""
    out_dtype = np.dtype(x.dtype if out_dtype is None else out_dtype)
    return _w8a8_qkvfc1_forward(
        x, params["wt"], params["bias"], params["inv_scales"],
        n=params["n"], k=params["k"], tn=params["tn"], tk=params["tk"],
        tm=tm, out_dtype=out_dtype)


# ---------------------------------------------------------------------------
# Reference + demo
# ---------------------------------------------------------------------------

def _reference(x, input_scales, weight, bias):
    """Pure-JAX reference mirroring the torch forward (bf16 weight, as on TPU)."""
    q_max = 2.0 ** (8 - 1) - 1.0
    scales = jnp.maximum(input_scales.astype(jnp.float32) / q_max, 1e-5)
    q_x = jnp.round(x.astype(jnp.float32) / scales)
    y = jnp.dot(q_x.astype(jnp.bfloat16), weight.astype(jnp.bfloat16).T,
                preferred_element_type=jnp.float32)
    return y + bias.reshape(1, -1).astype(jnp.float32)


if __name__ == "__main__":
    # Small shapes consistent with a Linear applied to (batch, seq, hidden) input, large
    # enough to exercise multiple N tiles (matmul grid = (1, 2, 1) at these defaults).
    batch, seq, in_features, out_features = 2, 64, 512, 768

    key = jax.random.PRNGKey(0)
    kx, kw = jax.random.split(key)

    x = jax.random.normal(kx, (batch, seq, in_features), dtype=jnp.float32)
    # Module __init__: weight ~ randn(out_features, in_features), bias = zeros(1, out).
    weight = jax.random.normal(kw, (out_features, in_features), dtype=jnp.float32)
    bias = jnp.zeros((1, out_features), dtype=jnp.float32)
    # Per-channel activation scales (abs-max over all but the last dim), as in practice.
    input_scales = jnp.max(jnp.abs(x), axis=(0, 1))

    # One-time model-load prep (cast + transpose + pad + scale reciprocal).
    params = prepare_qkvfc1(weight, bias, input_scales)

    y = w8a8_linear_qkvfc1(x, params)
    y = jax.block_until_ready(y)

    y_ref = _reference(x, input_scales, weight, bias)
    assert y.shape == (batch, seq, out_features)
    max_err = float(jnp.max(jnp.abs(y - y_ref)))
    assert jnp.allclose(y, y_ref, atol=5e-1, rtol=1e-3), f"mismatch vs reference: {max_err}"

    print("KERNEL_OK")
</pallas_src>

<mosaic_0001>
module attributes {stable_mosaic.version = 11 : i64} {
  func.func @_matmul_bias_kernel(%arg0: i32, %arg1: i32, %arg2: i32, %arg3: memref<128x512xbf16, #tpu.memory_space<vmem>>, %arg4: memref<512x512xbf16, #tpu.memory_space<vmem>>, %arg5: memref<1x512xf32, #tpu.memory_space<vmem>>, %arg6: memref<128x512xf32, #tpu.memory_space<vmem>>, %arg7: memref<128x512xf32, #tpu.memory_space<vmem>>) attributes {dimension_semantics = [#tpu.dimension_semantics<parallel>, #tpu.dimension_semantics<parallel>, #tpu.dimension_semantics<arbitrary>], iteration_bounds = array<i64: 1, 2, 1>, scalar_prefetch = 0 : i64, scratch_operands = 1 : i64, tpu.core_type = #tpu.core_type<tc>, window_params = [{transform_indices = @transform_0, window_bounds = array<i64: 128, 512>}, {transform_indices = @transform_1, window_bounds = array<i64: 512, 512>}, {transform_indices = @transform_2, window_bounds = array<i64: 1, 512>}, {transform_indices = @transform_3, window_bounds = array<i64: 128, 512>}]} {
    %c0_i32 = arith.constant 0 : i32
    %0 = arith.cmpi eq, %arg2, %c0_i32 : i32
    %1 = arith.extui %0 : i1 to i32
    %c0_i32_0 = arith.constant 0 : i32
    %2 = arith.cmpi ne, %1, %c0_i32_0 : i32
    scf.if %2 {
      %cst_10 = arith.constant 0.000000e+00 : f32
      %12 = vector.broadcast %cst_10 : f32 to vector<128x512xf32>
      %c0_11 = arith.constant 0 : index
      %c0_12 = arith.constant 0 : index
      %13 = vector.load %arg7[%c0_11, %c0_12] : memref<128x512xf32, #tpu.memory_space<vmem>>, vector<128x512xf32>
      tpu.vector_store %arg7[%c0_11, %c0_12], %12 {strides = array<i32>} : memref<128x512xf32, #tpu.memory_space<vmem>>, vector<128x512xf32>,
    } else {
    }
    %c0 = arith.constant 0 : index
    %c0_1 = arith.constant 0 : index
    %3 = vector.load %arg7[%c0, %c0_1] : memref<128x512xf32, #tpu.memory_space<vmem>>, vector<128x512xf32>
    %c0_2 = arith.constant 0 : index
    %c0_3 = arith.constant 0 : index
    %4 = vector.load %arg3[%c0_2, %c0_3] : memref<128x512xbf16, #tpu.memory_space<vmem>>, vector<128x512xbf16>
    %c0_4 = arith.constant 0 : index
    %c0_5 = arith.constant 0 : index
    %5 = vector.load %arg4[%c0_4, %c0_5] : memref<512x512xbf16, #tpu.memory_space<vmem>>, vector<512x512xbf16>
    %cst = arith.constant dense<0.000000e+00> : vector<128x512xf32>
    %6 = tpu.matmul %4, %5, %cst {dimension_numbers = #tpu.dot_dimension_numbers<[1], [0], [0], [1], [0, 0, 1, 1], [], []>} : vector<128x512xbf16>, vector<512x512xbf16>, vector<128x512xf32> -> vector<128x512xf32>
    %7 = arith.addf %3, %6 : vector<128x512xf32>
    %c0_6 = arith.constant 0 : index
    %c0_7 = arith.constant 0 : index
    %8 = vector.load %arg7[%c0_6, %c0_7] : memref<128x512xf32, #tpu.memory_space<vmem>>, vector<128x512xf32>
    tpu.vector_store %arg7[%c0_6, %c0_7], %7 {strides = array<i32>} : memref<128x512xf32, #tpu.memory_space<vmem>>, vector<128x512xf32>,
    %c0_i32_8 = arith.constant 0 : i32
    %9 = arith.cmpi eq, %arg2, %c0_i32_8 : i32
    %10 = arith.extui %9 : i1 to i32
    %c0_i32_9 = arith.constant 0 : i32
    %11 = arith.cmpi ne, %10, %c0_i32_9 : i32
    scf.if %11 {
      %c0_10 = arith.constant 0 : index
      %c0_11 = arith.constant 0 : index
      %12 = vector.load %arg7[%c0_10, %c0_11] : memref<128x512xf32, #tpu.memory_space<vmem>>, vector<128x512xf32>
      %c0_12 = arith.constant 0 : index
      %c0_13 = arith.constant 0 : index
      %13 = vector.load %arg5[%c0_12, %c0_13] : memref<1x512xf32, #tpu.memory_space<vmem>>, vector<1x512xf32>
      %14 = vector.broadcast %13 : vector<1x512xf32> to vector<128x512xf32>
      %15 = arith.addf %12, %14 : vector<128x512xf32>
      %c0_14 = arith.constant 0 : index
      %c0_15 = arith.constant 0 : index
      %16 = vector.load %arg6[%c0_14, %c0_15] : memref<128x512xf32, #tpu.memory_space<vmem>>, vector<128x512xf32>
      tpu.vector_store %arg6[%c0_14, %c0_15], %15 {strides = array<i32>} : memref<128x512xf32, #tpu.memory_space<vmem>>, vector<128x512xf32>,
    } else {
    }
    return
  }
  func.func @transform_0(%arg0: i32, %arg1: i32, %arg2: i32) -> (i32, i32) {
    %c0_i32 = arith.constant 0 : i32
    return %arg0, %arg2 : i32, i32
  }
  func.func @transform_1(%arg0: i32, %arg1: i32, %arg2: i32) -> (i32, i32) {
    %c0_i32 = arith.constant 0 : i32
    return %arg2, %arg1 : i32, i32
  }
  func.func @transform_2(%arg0: i32, %arg1: i32, %arg2: i32) -> (i32, i32) {
    %c0_i32 = arith.constant 0 : i32
    %c0_i32_0 = arith.constant 0 : i32
    return %c0_i32, %arg1 : i32, i32
  }
  func.func @transform_3(%arg0: i32, %arg1: i32, %arg2: i32) -> (i32, i32) {
    %c0_i32 = arith.constant 0 : i32
    return %arg0, %arg1 : i32, i32
  }
}

module attributes {stable_mosaic.version = 11 : i64} {
  func.func @_quantize_act_kernel(%arg0: i32, %arg1: i32, %arg2: memref<128x512xf32, #tpu.memory_space<vmem>>, %arg3: memref<1x512xf32, #tpu.memory_space<vmem>>, %arg4: memref<128x512xbf16, #tpu.memory_space<vmem>>) attributes {dimension_semantics = [#tpu.dimension_semantics<parallel>, #tpu.dimension_semantics<parallel>], iteration_bounds = array<i64: 1, 1>, scalar_prefetch = 0 : i64, scratch_operands = 0 : i64, tpu.core_type = #tpu.core_type<tc>, window_params = [{transform_indices = @transform_0, window_bounds = array<i64: 128, 512>}, {transform_indices = @transform_1, window_bounds = array<i64: 1, 512>}, {transform_indices = @transform_2, window_bounds = array<i64: 128, 512>}]} {
    %c0 = arith.constant 0 : index
    %c0_0 = arith.constant 0 : index
    %0 = vector.load %arg2[%c0, %c0_0] : memref<128x512xf32, #tpu.memory_space<vmem>>, vector<128x512xf32>
    %c0_1 = arith.constant 0 : index
    %c0_2 = arith.constant 0 : index
    %1 = vector.load %arg3[%c0_1, %c0_2] : memref<1x512xf32, #tpu.memory_space<vmem>>, vector<1x512xf32>
    %2 = vector.broadcast %1 : vector<1x512xf32> to vector<128x512xf32>
    %3 = arith.mulf %0, %2 : vector<128x512xf32>
    %4 = math.roundeven %3 : vector<128x512xf32>
    %5 = arith.truncf %4 : vector<128x512xf32> to vector<128x512xbf16>
    %c0_3 = arith.constant 0 : index
    %c0_4 = arith.constant 0 : index
    %6 = vector.load %arg4[%c0_3, %c0_4] : memref<128x512xbf16, #tpu.memory_space<vmem>>, vector<128x512xbf16>
    tpu.vector_store %arg4[%c0_3, %c0_4], %5 {strides = array<i32>} : memref<128x512xbf16, #tpu.memory_space<vmem>>, vector<128x512xbf16>,
    return
  }
  func.func @transform_0(%arg0: i32, %arg1: i32) -> (i32, i32) {
    %c0_i32 = arith.constant 0 : i32
    return %arg0, %arg1 : i32, i32
  }
  func.func @transform_1(%arg0: i32, %arg1: i32) -> (i32, i32) {
    %c0_i32 = arith.constant 0 : i32
    %c0_i32_0 = arith.constant 0 : i32
    return %c0_i32, %arg1 : i32, i32
  }
  func.func @transform_2(%arg0: i32, %arg1: i32) -> (i32, i32) {
    %c0_i32 = arith.constant 0 : i32
    return %arg0, %arg1 : i32, i32
  }
}

</mosaic_0001>

<llo_original>
// kernel: _w8a8_qkvfc1_forward.2
$region0: #{_w8a8_qkvfc1_forward.2}
  #allocation0 [shape = 'u32[]', space=smem, size = 0x4, offset = 0x4, fixed_abs, tag = 'smem constant byte address 0x4 - core index']
  #allocation1 [shape = 'u32[144,128]{1,0:T(1,128)}', space=vmem, size = 0x12000, scoped, tag = 'internal scratch']
  %s0 = inlined_call_operand.hbm [shape: f32[128,512], index: 0, kind: input, shape index: {}]
  %s1 = inlined_call_operand.vmem [shape: f32[1,512], index: 1, kind: input, shape index: {}]
  %s2 = inlined_call_operand.vmem [shape: bf16[128,512], index: 2, kind: output, shape index: {}]
  %s3 = sld [smem:[#allocation0]]
  $region22: #{_w8a8_qkvfc1_forward.2} parent=0
    _
  %s5 = ssub.s32 1, %s3
  %s6 = scalar_select 0, %s5, %s3
  $region1: #{_w8a8_qkvfc1_forward.2} parent=0
    #allocation2 [shape = 'u8[262144]{0}', space=vmem, size = 0x40000, scoped, tag = 'input window, operand 0, single buffered']
    #allocation3 [shape = 's32[1]{0}', space=sflag, size = 0x4, scoped, tag = 'scoped memory for _w8a8_qkvfc1_forward.2']
    %7 = vsyncpa [#allocation3], 0
    // Predicated region
    $region2: #{_w8a8_qkvfc1_forward.2} parent=1 // pred_check
      _
    $region3: #{_w8a8_qkvfc1_forward.2} parent=1 // pred_check_branch
      %9 = sbr.rel (0) target = $region5
    $region4: #{_w8a8_qkvfc1_forward.2} parent=1 // pred_region
      %s11 = ssub.s32 8192, 8192
      %12 = vsyncadd [#allocation3], %s11
      %s13 = sshll.u32 [#allocation2], 4
      %s14 = int_to_ptr.vmem [resolvable:$true] %s13
      %19 = dma.hbm_to_vmem [thread:$0]  %s0, 8192, %s14, [#allocation3], 512, 512, 32
    $region5: #{_w8a8_qkvfc1_forward.2} parent=1 // pred_fallthru
      _
    // Predicated region
    $region6: #{_w8a8_qkvfc1_forward.2} parent=1 // pred_check
      _
    $region7: #{_w8a8_qkvfc1_forward.2} parent=1 // pred_check_branch
      %21 = sbr.rel (0) target = $region9
    $region8: #{_w8a8_qkvfc1_forward.2} parent=1 // pred_region
      _
    $region9: #{_w8a8_qkvfc1_forward.2} parent=1 // pred_fallthru
      _
    // Predicated region
    $region10: #{_w8a8_qkvfc1_forward.2} parent=1 // pred_check
      _
    $region11: #{_w8a8_qkvfc1_forward.2} parent=1 // pred_check_branch
      %23 = sbr.rel (0) target = $region13
    $region12: #{_w8a8_qkvfc1_forward.2} parent=1 // pred_region
      %24 = dma.done [#allocation3], 8192
    $region13: #{_w8a8_qkvfc1_forward.2} parent=1 // pred_fallthru
      _
    %v25 = vld [vmem:[#allocation2] sm:$0xff]
    %v26 = vld [vmem:[#allocation2 + $0x8] sm:$0xff]
    %v27 = vld [vmem:[#allocation2 + $0x10] sm:$0xff]
    %v28 = vld [vmem:[#allocation2 + $0x18] sm:$0xff]
    %v29 = vld [vmem:[#allocation2 + $0x20] sm:$0xff]
    %v30 = vld [vmem:[#allocation2 + $0x28] sm:$0xff]
    %v31 = vld [vmem:[#allocation2 + $0x30] sm:$0xff]
    %v32 = vld [vmem:[#allocation2 + $0x38] sm:$0xff]
    %v33 = vld [vmem:[#allocation2 + $0x40] sm:$0xff]
    %v34 = vld [vmem:[#allocation2 + $0x48] sm:$0xff]
    %v35 = vld [vmem:[#allocation2 + $0x50] sm:$0xff]
    %v36 = vld [vmem:[#allocation2 + $0x58] sm:$0xff]
    %v37 = vld [vmem:[#allocation2 + $0x60] sm:$0xff]
    %v38 = vld [vmem:[#allocation2 + $0x68] sm:$0xff]
    %v39 = vld [vmem:[#allocation2 + $0x70] sm:$0xff]
    %v40 = vld [vmem:[#allocation2 + $0x78] sm:$0xff]
    %v41 = vld [vmem:[#allocation2 + $0x80] sm:$0xff]
    %v42 = vld [vmem:[#allocation2 + $0x88] sm:$0xff]
    %v43 = vld [vmem:[#allocation2 + $0x90] sm:$0xff]
    %v44 = vld [vmem:[#allocation2 + $0x98] sm:$0xff]
    %v45 = vld [vmem:[#allocation2 + $0xa0] sm:$0xff]
    %v46 = vld [vmem:[#allocation2 + $0xa8] sm:$0xff]
    %v47 = vld [vmem:[#allocation2 + $0xb0] sm:$0xff]
    %v48 = vld [vmem:[#allocation2 + $0xb8] sm:$0xff]
    %v49 = vld [vmem:[#allocation2 + $0xc0] sm:$0xff]
    %v50 = vld [vmem:[#allocation2 + $0xc8] sm:$0xff]
    %v51 = vld [vmem:[#allocation2 + $0xd0] sm:$0xff]
    %v52 = vld [vmem:[#allocation2 + $0xd8] sm:$0xff]
    %v53 = vld [vmem:[#allocation2 + $0xe0] sm:$0xff]
    %v54 = vld [vmem:[#allocation2 + $0xe8] sm:$0xff]
    %v55 = vld [vmem:[#allocation2 + $0xf0] sm:$0xff]
    %v56 = vld [vmem:[#allocation2 + $0xf8] sm:$0xff]
    %v57 = vld [vmem:[#allocation2 + $0x100] sm:$0xff]
    %v58 = vld [vmem:[#allocation2 + $0x108] sm:$0xff]
    %v59 = vld [vmem:[#allocation2 + $0x110] sm:$0xff]
    %v60 = vld [vmem:[#allocation2 + $0x118] sm:$0xff]
    %v61 = vld [vmem:[#allocation2 + $0x120] sm:$0xff]
    %v62 = vld [vmem:[#allocation2 + $0x128] sm:$0xff]
    %v63 = vld [vmem:[#allocation2 + $0x130] sm:$0xff]
    %v64 = vld [vmem:[#allocation2 + $0x138] sm:$0xff]
    %v65 = vld [vmem:[#allocation2 + $0x140] sm:$0xff]
    %v66 = vld [vmem:[#allocation2 + $0x148] sm:$0xff]
    %v67 = vld [vmem:[#allocation2 + $0x150] sm:$0xff]
    %v68 = vld [vmem:[#allocation2 + $0x158] sm:$0xff]
    %v69 = vld [vmem:[#allocation2 + $0x160] sm:$0xff]
    %v70 = vld [vmem:[#allocation2 + $0x168] sm:$0xff]
    %v71 = vld [vmem:[#allocation2 + $0x170] sm:$0xff]
    %v72 = vld [vmem:[#allocation2 + $0x178] sm:$0xff]
    %v73 = vld [vmem:[#allocation2 + $0x180] sm:$0xff]
    %v74 = vld [vmem:[#allocation2 + $0x188] sm:$0xff]
    %v75 = vld [vmem:[#allocation2 + $0x190] sm:$0xff]
    %v76 = vld [vmem:[#allocation2 + $0x198] sm:$0xff]
    %v77 = vld [vmem:[#allocation2 + $0x1a0] sm:$0xff]
    %v78 = vld [vmem:[#allocation2 + $0x1a8] sm:$0xff]
    %v79 = vld [vmem:[#allocation2 + $0x1b0] sm:$0xff]
    %v80 = vld [vmem:[#allocation2 + $0x1b8] sm:$0xff]
    %v81 = vld [vmem:[#allocation2 + $0x1c0] sm:$0xff]
    %v82 = vld [vmem:[#allocation2 + $0x1c8] sm:$0xff]
    %v83 = vld [vmem:[#allocation2 + $0x1d0] sm:$0xff]
    %v84 = vld [vmem:[#allocation2 + $0x1d8] sm:$0xff]
    %v85 = vld [vmem:[#allocation2 + $0x1e0] sm:$0xff]
    %v86 = vld [vmem:[#allocation2 + $0x1e8] sm:$0xff]
    %v87 = vld [vmem:[#allocation2 + $0x1f0] sm:$0xff]
    %v88 = vld [vmem:[#allocation2 + $0x1f8] sm:$0xff]
    %v89 = vld [vmem:[%s1] sm:$0xf]
    %v91 = vlaneseq
    %v92 = vshrl.u32 %v91, 7
    %v93 = vsub.s32 0, %v92
    %v94 = vrot.slane %v89, %v93
    %v95 = vlaneseq
    %v96 = vshrl.u32 %v95, 7
    %v97 = vsub.s32 1, %v96
    %v98 = vrot.slane %v89, %v97
    %v99 = vlaneseq
    %v100 = vshrl.u32 %v99, 7
    %v101 = vsub.s32 2, %v100
    %v102 = vrot.slane %v89, %v101
    %v103 = vlaneseq
    %v104 = vshrl.u32 %v103, 7
    %v105 = vsub.s32 3, %v104
    %v106 = vrot.slane %v89, %v105
    %v111 = vmul.f32 %v25, %v94
    %v112 = vmul.f32 %v26, %v98
    %v113 = vmul.f32 %v27, %v102
    %v114 = vmul.f32 %v28, %v106
    %v115 = vmul.f32 %v29, %v94
    %v116 = vmul.f32 %v30, %v98
    %v117 = vmul.f32 %v31, %v102
    %v118 = vmul.f32 %v32, %v106
    %v119 = vmul.f32 %v33, %v94
    %v120 = vmul.f32 %v34, %v98
    %v121 = vmul.f32 %v35, %v102
    %v122 = vmul.f32 %v36, %v106
    %v123 = vmul.f32 %v37, %v94
    %v124 = vmul.f32 %v38, %v98
    %v125 = vmul.f32 %v39, %v102
    %v126 = vmul.f32 %v40, %v106
    %v127 = vmul.f32 %v41, %v94
    %v128 = vmul.f32 %v42, %v98
    %v129 = vmul.f32 %v43, %v102
    %v130 = vmul.f32 %v44, %v106
    %v131 = vmul.f32 %v45, %v94
    %v132 = vmul.f32 %v46, %v98
    %v133 = vmul.f32 %v47, %v102
    %v134 = vmul.f32 %v48, %v106
    %v135 = vmul.f32 %v49, %v94
    %v136 = vmul.f32 %v50, %v98
    %v137 = vmul.f32 %v51, %v102
    %v138 = vmul.f32 %v52, %v106
    %v139 = vmul.f32 %v53, %v94
    %v140 = vmul.f32 %v54, %v98
    %v141 = vmul.f32 %v55, %v102
    %v142 = vmul.f32 %v56, %v106
    %v143 = vmul.f32 %v57, %v94
    %v144 = vmul.f32 %v58, %v98
    %v145 = vmul.f32 %v59, %v102
    %v146 = vmul.f32 %v60, %v106
    %v147 = vmul.f32 %v61, %v94
    %v148 = vmul.f32 %v62, %v98
    %v149 = vmul.f32 %v63, %v102
    %v150 = vmul.f32 %v64, %v106
    %v151 = vmul.f32 %v65, %v94
    %v152 = vmul.f32 %v66, %v98
    %v153 = vmul.f32 %v67, %v102
    %v154 = vmul.f32 %v68, %v106
    %v155 = vmul.f32 %v69, %v94
    %v156 = vmul.f32 %v70, %v98
    %v157 = vmul.f32 %v71, %v102
    %v158 = vmul.f32 %v72, %v106
    %v159 = vmul.f32 %v73, %v94
    %v160 = vmul.f32 %v74, %v98
    %v161 = vmul.f32 %v75, %v102
    %v162 = vmul.f32 %v76, %v106
    %v163 = vmul.f32 %v77, %v94
    %v164 = vmul.f32 %v78, %v98
    %v165 = vmul.f32 %v79, %v102
    %v166 = vmul.f32 %v80, %v106
    %v167 = vmul.f32 %v81, %v94
    %v168 = vmul.f32 %v82, %v98
    %v169 = vmul.f32 %v83, %v102
    %v170 = vmul.f32 %v84, %v106
    %v171 = vmul.f32 %v85, %v94
    %v172 = vmul.f32 %v86, %v98
    %v173 = vmul.f32 %v87, %v102
    %v174 = vmul.f32 %v88, %v106
    %v175 = vround.ne.pseudo %v111
    %v176 = vround.ne.pseudo %v112
    %v177 = vround.ne.pseudo %v113
    %v178 = vround.ne.pseudo %v114
    %v179 = vround.ne.pseudo %v115
    %v180 = vround.ne.pseudo %v116
    %v181 = vround.ne.pseudo %v117
    %v182 = vround.ne.pseudo %v118
    %v183 = vround.ne.pseudo %v119
    %v184 = vround.ne.pseudo %v120
    %v185 = vround.ne.pseudo %v121
    %v186 = vround.ne.pseudo %v122
    %v187 = vround.ne.pseudo %v123
    %v188 = vround.ne.pseudo %v124
    %v189 = vround.ne.pseudo %v125
    %v190 = vround.ne.pseudo %v126
    %v191 = vround.ne.pseudo %v127
    %v192 = vround.ne.pseudo %v128
    %v193 = vround.ne.pseudo %v129
    %v194 = vround.ne.pseudo %v130
    %v195 = vround.ne.pseudo %v131
    %v196 = vround.ne.pseudo %v132
    %v197 = vround.ne.pseudo %v133
    %v198 = vround.ne.pseudo %v134
    %v199 = vround.ne.pseudo %v135
    %v200 = vround.ne.pseudo %v136
    %v201 = vround.ne.pseudo %v137
    %v202 = vround.ne.pseudo %v138
    %v203 = vround.ne.pseudo %v139
    %v204 = vround.ne.pseudo %v140
    %v205 = vround.ne.pseudo %v141
    %v206 = vround.ne.pseudo %v142
    %v207 = vround.ne.pseudo %v143
    %v208 = vround.ne.pseudo %v144
    %v209 = vround.ne.pseudo %v145
    %v210 = vround.ne.pseudo %v146
    %v211 = vround.ne.pseudo %v147
    %v212 = vround.ne.pseudo %v148
    %v213 = vround.ne.pseudo %v149
    %v214 = vround.ne.pseudo %v150
    %v215 = vround.ne.pseudo %v151
    %v216 = vround.ne.pseudo %v152
    %v217 = vround.ne.pseudo %v153
    %v218 = vround.ne.pseudo %v154
    %v219 = vround.ne.pseudo %v155
    %v220 = vround.ne.pseudo %v156
    %v221 = vround.ne.pseudo %v157
    %v222 = vround.ne.pseudo %v158
    %v223 = vround.ne.pseudo %v159
    %v224 = vround.ne.pseudo %v160
    %v225 = vround.ne.pseudo %v161
    %v226 = vround.ne.pseudo %v162
    %v227 = vround.ne.pseudo %v163
    %v228 = vround.ne.pseudo %v164
    %v229 = vround.ne.pseudo %v165
    %v230 = vround.ne.pseudo %v166
    %v231 = vround.ne.pseudo %v167
    %v232 = vround.ne.pseudo %v168
    %v233 = vround.ne.pseudo %v169
    %v234 = vround.ne.pseudo %v170
    %v235 = vround.ne.pseudo %v171
    %v236 = vround.ne.pseudo %v172
    %v237 = vround.ne.pseudo %v173
    %v238 = vround.ne.pseudo %v174
    %v239 = vpack.c.bf16 %v179, %v175
    %v240 = vpack.c.bf16 %v180, %v176
    %v241 = vpack.c.bf16 %v181, %v177
    %v242 = vpack.c.bf16 %v182, %v178
    %v243 = vpack.c.bf16 %v187, %v183
    %v244 = vpack.c.bf16 %v188, %v184
    %v245 = vpack.c.bf16 %v189, %v185
    %v246 = vpack.c.bf16 %v190, %v186
    %v247 = vpack.c.bf16 %v195, %v191
    %v248 = vpack.c.bf16 %v196, %v192
    %v249 = vpack.c.bf16 %v197, %v193
    %v250 = vpack.c.bf16 %v198, %v194
    %v251 = vpack.c.bf16 %v203, %v199
    %v252 = vpack.c.bf16 %v204, %v200
    %v253 = vpack.c.bf16 %v205, %v201
    %v254 = vpack.c.bf16 %v206, %v202
    %v255 = vpack.c.bf16 %v211, %v207
    %v256 = vpack.c.bf16 %v212, %v208
    %v257 = vpack.c.bf16 %v213, %v209
    %v258 = vpack.c.bf16 %v214, %v210
    %v259 = vpack.c.bf16 %v219, %v215
    %v260 = vpack.c.bf16 %v220, %v216
    %v261 = vpack.c.bf16 %v221, %v217
    %v262 = vpack.c.bf16 %v222, %v218
    %v263 = vpack.c.bf16 %v227, %v223
    %v264 = vpack.c.bf16 %v228, %v224
    %v265 = vpack.c.bf16 %v229, %v225
    %v266 = vpack.c.bf16 %v230, %v226
    %v267 = vpack.c.bf16 %v235, %v231
    %v268 = vpack.c.bf16 %v236, %v232
    %v269 = vpack.c.bf16 %v237, %v233
    %v270 = vpack.c.bf16 %v238, %v234
    %v303 = vunpack.c.l.b16 %v239
    %v304 = vunpack.c.l.b16 %v240
    %v305 = vunpack.c.l.b16 %v241
    %v306 = vunpack.c.l.b16 %v242
    %v307 = vunpack.c.h.b16 %v239
    %v308 = vunpack.c.h.b16 %v240
    %v309 = vunpack.c.h.b16 %v241
    %v310 = vunpack.c.h.b16 %v242
    %v311 = vunpack.c.l.b16 %v243
    %v312 = vunpack.c.l.b16 %v244
    %v313 = vunpack.c.l.b16 %v245
    %v314 = vunpack.c.l.b16 %v246
    %v315 = vunpack.c.h.b16 %v243
    %v316 = vunpack.c.h.b16 %v244
    %v317 = vunpack.c.h.b16 %v245
    %v318 = vunpack.c.h.b16 %v246
    %v319 = vunpack.c.l.b16 %v247
    %v320 = vunpack.c.l.b16 %v248
    %v321 = vunpack.c.l.b16 %v249
    %v322 = vunpack.c.l.b16 %v250
    %v323 = vunpack.c.h.b16 %v247
    %v324 = vunpack.c.h.b16 %v248
    %v325 = vunpack.c.h.b16 %v249
    %v326 = vunpack.c.h.b16 %v250
    %v327 = vunpack.c.l.b16 %v251
    %v328 = vunpack.c.l.b16 %v252
    %v329 = vunpack.c.l.b16 %v253
    %v330 = vunpack.c.l.b16 %v254
    %v331 = vunpack.c.h.b16 %v251
    %v332 = vunpack.c.h.b16 %v252
    %v333 = vunpack.c.h.b16 %v253
    %v334 = vunpack.c.h.b16 %v254
    %v335 = vunpack.c.l.b16 %v255
    %v336 = vunpack.c.l.b16 %v256
    %v337 = vunpack.c.l.b16 %v257
    %v338 = vunpack.c.l.b16 %v258
    %v339 = vunpack.c.h.b16 %v255
    %v340 = vunpack.c.h.b16 %v256
    %v341 = vunpack.c.h.b16 %v257
    %v342 = vunpack.c.h.b16 %v258
    %v343 = vunpack.c.l.b16 %v259
    %v344 = vunpack.c.l.b16 %v260
    %v345 = vunpack.c.l.b16 %v261
    %v346 = vunpack.c.l.b16 %v262
    %v347 = vunpack.c.h.b16 %v259
    %v348 = vunpack.c.h.b16 %v260
    %v349 = vunpack.c.h.b16 %v261
    %v350 = vunpack.c.h.b16 %v262
    %v351 = vunpack.c.l.b16 %v263
    %v352 = vunpack.c.l.b16 %v264
    %v353 = vunpack.c.l.b16 %v265
    %v354 = vunpack.c.l.b16 %v266
    %v355 = vunpack.c.h.b16 %v263
    %v356 = vunpack.c.h.b16 %v264
    %v357 = vunpack.c.h.b16 %v265
    %v358 = vunpack.c.h.b16 %v266
    %v359 = vunpack.c.l.b16 %v267
    %v360 = vunpack.c.l.b16 %v268
    %v361 = vunpack.c.l.b16 %v269
    %v362 = vunpack.c.l.b16 %v270
    %v363 = vunpack.c.h.b16 %v267
    %v364 = vunpack.c.h.b16 %v268
    %v365 = vunpack.c.h.b16 %v269
    %v366 = vunpack.c.h.b16 %v270
    %v367 = vpack.c.b16 %v304, %v303
    %v368 = vpack.c.b16 %v306, %v305
    %v369 = vpack.c.b16 %v308, %v307
    %v370 = vpack.c.b16 %v310, %v309
    %v371 = vpack.c.b16 %v312, %v311
    %v372 = vpack.c.b16 %v314, %v313
    %v373 = vpack.c.b16 %v316, %v315
    %v374 = vpack.c.b16 %v318, %v317
    %v375 = vpack.c.b16 %v320, %v319
    %v376 = vpack.c.b16 %v322, %v321
    %v377 = vpack.c.b16 %v324, %v323
    %v378 = vpack.c.b16 %v326, %v325
    %v379 = vpack.c.b16 %v328, %v327
    %v380 = vpack.c.b16 %v330, %v329
    %v381 = vpack.c.b16 %v332, %v331
    %v382 = vpack.c.b16 %v334, %v333
    %v383 = vpack.c.b16 %v336, %v335
    %v384 = vpack.c.b16 %v338, %v337
    %v385 = vpack.c.b16 %v340, %v339
    %v386 = vpack.c.b16 %v342, %v341
    %v387 = vpack.c.b16 %v344, %v343
    %v388 = vpack.c.b16 %v346, %v345
    %v389 = vpack.c.b16 %v348, %v347
    %v390 = vpack.c.b16 %v350, %v349
    %v391 = vpack.c.b16 %v352, %v351
    %v392 = vpack.c.b16 %v354, %v353
    %v393 = vpack.c.b16 %v356, %v355
    %v394 = vpack.c.b16 %v358, %v357
    %v395 = vpack.c.b16 %v360, %v359
    %v396 = vpack.c.b16 %v362, %v361
    %v397 = vpack.c.b16 %v364, %v363
    %v398 = vpack.c.b16 %v366, %v365
    %431 = vst [vmem:[%s2] sm:$0xff] %v367
    %432 = vst [vmem:[%s2 + $0x8] sm:$0xff] %v368
    %433 = vst [vmem:[%s2 + $0x10] sm:$0xff] %v369
    %434 = vst [vmem:[%s2 + $0x18] sm:$0xff] %v370
    %435 = vst [vmem:[%s2 + $0x20] sm:$0xff] %v371
    %436 = vst [vmem:[%s2 + $0x28] sm:$0xff] %v372
    %437 = vst [vmem:[%s2 + $0x30] sm:$0xff] %v373
    %438 = vst [vmem:[%s2 + $0x38] sm:$0xff] %v374
    %439 = vst [vmem:[%s2 + $0x40] sm:$0xff] %v375
    %440 = vst [vmem:[%s2 + $0x48] sm:$0xff] %v376
    %441 = vst [vmem:[%s2 + $0x50] sm:$0xff] %v377
    %442 = vst [vmem:[%s2 + $0x58] sm:$0xff] %v378
    %443 = vst [vmem:[%s2 + $0x60] sm:$0xff] %v379
    %444 = vst [vmem:[%s2 + $0x68] sm:$0xff] %v380
    %445 = vst [vmem:[%s2 + $0x70] sm:$0xff] %v381
    %446 = vst [vmem:[%s2 + $0x78] sm:$0xff] %v382
    %447 = vst [vmem:[%s2 + $0x80] sm:$0xff] %v383
    %448 = vst [vmem:[%s2 + $0x88] sm:$0xff] %v384
    %449 = vst [vmem:[%s2 + $0x90] sm:$0xff] %v385
    %450 = vst [vmem:[%s2 + $0x98] sm:$0xff] %v386
    %451 = vst [vmem:[%s2 + $0xa0] sm:$0xff] %v387
    %452 = vst [vmem:[%s2 + $0xa8] sm:$0xff] %v388
    %453 = vst [vmem:[%s2 + $0xb0] sm:$0xff] %v389
    %454 = vst [vmem:[%s2 + $0xb8] sm:$0xff] %v390
    %455 = vst [vmem:[%s2 + $0xc0] sm:$0xff] %v391
    %456 = vst [vmem:[%s2 + $0xc8] sm:$0xff] %v392
    %457 = vst [vmem:[%s2 + $0xd0] sm:$0xff] %v393
    %458 = vst [vmem:[%s2 + $0xd8] sm:$0xff] %v394
    %459 = vst [vmem:[%s2 + $0xe0] sm:$0xff] %v395
    %460 = vst [vmem:[%s2 + $0xe8] sm:$0xff] %v396
    %461 = vst [vmem:[%s2 + $0xf0] sm:$0xff] %v397
    %462 = vst [vmem:[%s2 + $0xf8] sm:$0xff] %v398
    // Predicated region
    $region14: #{_w8a8_qkvfc1_forward.2} parent=1 // pred_check
      _
    $region15: #{_w8a8_qkvfc1_forward.2} parent=1 // pred_check_branch
      %464 = sbr.rel (0) target = $region17
    $region16: #{_w8a8_qkvfc1_forward.2} parent=1 // pred_region
      _
    $region17: #{_w8a8_qkvfc1_forward.2} parent=1 // pred_fallthru
      _
    // Predicated region
    $region18: #{_w8a8_qkvfc1_forward.2} parent=1 // pred_check
      _
    $region19: #{_w8a8_qkvfc1_forward.2} parent=1 // pred_check_branch
      %466 = sbr.rel (0) target = $region21
    $region20: #{_w8a8_qkvfc1_forward.2} parent=1 // pred_region
      _
    $region21: #{_w8a8_qkvfc1_forward.2} parent=1 // pred_fallthru
      _
    %467 = vsyncpa [#allocation3], 1

// kernel: _w8a8_qkvfc1_forward.3
$region0: #{_w8a8_qkvfc1_forward.3}
  #allocation0 [shape = 'u32[]', space=smem, size = 0x4, offset = 0x4, fixed_abs, tag = 'smem constant byte address 0x4 - core index']
  #allocation1 [shape = 'u32[144,128]{1,0:T(1,128)}', space=vmem, size = 0x12000, scoped, tag = 'internal scratch']
  #allocation2 [shape = 'f32[128,512]{1,0:T(8,128)}', space=vmem, size = 0x40000, scoped, tag = 'scratch operand']
  %s0 = inlined_call_operand.vmem [shape: bf16[128,512], index: 0, kind: input, shape index: {}]
  %s1 = inlined_call_operand.hbm [shape: bf16[512,1024], index: 1, kind: input, shape index: {}]
  %s2 = inlined_call_operand.vmem [shape: f32[1,1024], index: 2, kind: input, shape index: {}]
  %s3 = inlined_call_operand.vmem [shape: f32[128,1024], index: 3, kind: output, shape index: {}]
  %s4 = sld [smem:[#allocation0]]
  $region76: #{_w8a8_qkvfc1_forward.3} parent=0
    _
  %s6 = ssub.s32 1, %s4
  %s7 = scalar_select 0, %s6, %s4
  $region1: #{_w8a8_qkvfc1_forward.3} parent=0
    #allocation3 [shape = 'u8[1048576]{0}', space=vmem, size = 0x100000, scoped, tag = 'input window, operand 1']
    #allocation4 [shape = 's32[2]{0}', space=sflag, size = 0x8, scoped, tag = 'scoped memory for _w8a8_qkvfc1_forward.3']
    #allocation5 [shape = 'u8[524288]{0}', space=vmem, size = 0x80000, scoped, tag = 'output window, operand 0']
    %8 = vsyncpa [#allocation4], 0
    %s9 = scalar_lea.sflag [#allocation4], 1
    %10 = vsyncpa %s9, 0
    loop: start=0, step=1, limit=4
    $region2: #{_w8a8_qkvfc1_forward.3} parent=1 // loop_pre_header
      _
    $region3: #{_w8a8_qkvfc1_forward.3} parent=1 // loop_header
      %s12 = sphi 0, %s16
      %p13 = scmp.ge.s32.totalorder %s12, 4
      %s19 = sphi 0, %s38
      %s20 = sphi 0, %s34
      %s21 = sphi 0, %s30
      %s22 = sphi 0, %s19
      %s23 = sphi 0, %s20
      %s24 = sphi 0, %s21
      %s25 = sphi 0, %s22
      %s26 = sphi 0, %s23
      %s27 = sphi 0, %s24
      %s43 = sphi 0, %s45
      %s46 = sphi 0, %s43
      %s47 = sphi 0, %s46
      %s63 = sphi 0, %s47
      %s71 = sphi 0, %s73
      %s74 = sphi 0, %s71
      %s75 = sphi 0, %s74
      %s91 = sphi 0, %s75
      %s97 = sphi 0, %s99
      %s100 = sphi 0, %s97
      %s101 = sphi 0, %s100
      %s117 = sphi 0, %s101
      %s125 = sphi 0, %s127
      %s128 = sphi 0, %s125
      %s129 = sphi 0, %s128
      %s145 = sphi 0, %s129
    $region4: #{_w8a8_qkvfc1_forward.3} parent=1 // loop_header_branch
      %15 = sbr.rel (%p13) target = $region8
    $region5: #{_w8a8_qkvfc1_forward.3} parent=1 // loop_body
      %s17 = ssub.s32 %s12, 1
      %s18 = ssub.s32 %s12, 2
      %s28 = sadd.s32 1, %s21
      %p29 = scmp.ge.s32.totalorder %s28, 1
      %s30 = scalar_select %p29, 0, %s28
      %s31 = sadd.s32 1, %s20
      %s32 = scalar_select %p29, %s31, %s20
      %p33 = scmp.ge.s32.totalorder %s32, 2
      %s34 = scalar_select %p33, 0, %s32
      %s35 = sadd.s32 1, %s19
      %s36 = scalar_select %p33, %s35, %s19
      %p37 = scmp.ge.s32.totalorder %s36, 1
      %s38 = scalar_select %p37, 0, %s36
      %s39 = ssub.s32 %s19, %s38
      %s40 = ssub.s32 %s21, %s30
      %s41 = sor.u32 %s39, %s40
      %p42 = scmp.eq.s32.totalorder %s41, 0
      %s44 = sadd.s32 %s43, 1
      %s45 = scalar_select %p42, %s43, %s44
      %p48 = pneg %p42
      %p49 = scmp.eq.s32.totalorder %s12, 1
      %p50 = por %p48, %p49
      %p51 = scmp.ne.s32.totalorder %s43, %s46
      %p52 = scmp.eq.s32.totalorder %s12, 0
      %p53 = por %p51, %p52
      %p54 = scmp.ne.s32.totalorder %s43, %s46
      %p55 = scmp.eq.s32.totalorder %s17, 1
      %p56 = por %p54, %p55
      %p57 = scmp.ne.s32.totalorder %s46, %s47
      %p58 = scmp.eq.s32.totalorder %s17, 0
      %p59 = por %p57, %p58
      %p60 = scmp.ne.s32.totalorder %s46, %s47
      %p61 = scmp.eq.s32.totalorder %s18, 1
      %p62 = por %p60, %p61
      %p64 = scmp.ne.s32.totalorder %s47, %s63
      %p65 = scmp.eq.s32.totalorder %s18, 0
      %p66 = por %p64, %p65
      %s67 = ssub.s32 %s21, %s30
      %s68 = ssub.s32 %s20, %s34
      %s69 = sor.u32 %s67, %s68
      %p70 = scmp.eq.s32.totalorder %s69, 0
      %s72 = sadd.s32 %s71, 1
      %s73 = scalar_select %p70, %s71, %s72
      %p76 = pneg %p70
      %p77 = scmp.eq.s32.totalorder %s12, 1
      %p78 = por %p76, %p77
      %p79 = scmp.ne.s32.totalorder %s71, %s74
      %p80 = scmp.eq.s32.totalorder %s12, 0
      %p81 = por %p79, %p80
      %p82 = scmp.ne.s32.totalorder %s71, %s74
      %p83 = scmp.eq.s32.totalorder %s17, 1
      %p84 = por %p82, %p83
      %p85 = scmp.ne.s32.totalorder %s74, %s75
      %p86 = scmp.eq.s32.totalorder %s17, 0
      %p87 = por %p85, %p86
      %p88 = scmp.ne.s32.totalorder %s74, %s75
      %p89 = scmp.eq.s32.totalorder %s18, 1
      %p90 = por %p88, %p89
      %p92 = scmp.ne.s32.totalorder %s75, %s91
      %p93 = scmp.eq.s32.totalorder %s18, 0
      %p94 = por %p92, %p93
      %s95 = ssub.s32 %s20, %s34
      %p96 = scmp.eq.s32.totalorder %s95, 0
      %s98 = sadd.s32 %s97, 1
      %s99 = scalar_select %p96, %s97, %s98
      %p102 = pneg %p96
      %p103 = scmp.eq.s32.totalorder %s12, 1
      %p104 = por %p102, %p103
      %p105 = scmp.ne.s32.totalorder %s97, %s100
      %p106 = scmp.eq.s32.totalorder %s12, 0
      %p107 = por %p105, %p106
      %p108 = scmp.ne.s32.totalorder %s97, %s100
      %p109 = scmp.eq.s32.totalorder %s17, 1
      %p110 = por %p108, %p109
      %p111 = scmp.ne.s32.totalorder %s100, %s101
      %p112 = scmp.eq.s32.totalorder %s17, 0
      %p113 = por %p111, %p112
      %p114 = scmp.ne.s32.totalorder %s100, %s101
      %p115 = scmp.eq.s32.totalorder %s18, 1
      %p116 = por %p114, %p115
      %p118 = scmp.ne.s32.totalorder %s101, %s117
      %p119 = scmp.eq.s32.totalorder %s18, 0
      %p120 = por %p118, %p119
      %s121 = ssub.s32 %s19, %s38
      %s122 = ssub.s32 %s20, %s34
      %s123 = sor.u32 %s121, %s122
      %p124 = scmp.eq.s32.totalorder %s123, 0
      %s126 = sadd.s32 %s125, 1
      %s127 = scalar_select %p124, %s125, %s126
      %p130 = pneg %p124
      %p131 = scmp.eq.s32.totalorder %s12, 1
      %p132 = por %p130, %p131
      %p133 = scmp.ne.s32.totalorder %s125, %s128
      %p134 = scmp.eq.s32.totalorder %s12, 0
      %p135 = por %p133, %p134
      %p136 = scmp.ne.s32.totalorder %s125, %s128
      %p137 = scmp.eq.s32.totalorder %s17, 1
      %p138 = por %p136, %p137
      %p139 = scmp.ne.s32.totalorder %s128, %s129
      %p140 = scmp.eq.s32.totalorder %s17, 0
      %p141 = por %p139, %p140
      %p142 = scmp.ne.s32.totalorder %s128, %s129
      %p143 = scmp.eq.s32.totalorder %s18, 1
      %p144 = por %p142, %p143
      %p146 = scmp.ne.s32.totalorder %s129, %s145
      %p147 = scmp.eq.s32.totalorder %s18, 0
      %p148 = por %p146, %p147
      %p149 = scmp.le.s32.totalorder 1, %s12
      %p150 = scmp.lt.s32.totalorder %s12, 3
      %p151 = pnand %p149, %p150
      %p152 = pneg %p151
      // Predicated region
      $region9: #{_w8a8_qkvfc1_forward.3} parent=5 // pred_check
        _
      $region10: #{_w8a8_qkvfc1_forward.3} parent=5 // pred_check_branch
        %154 = sbr.rel (%p151) target = $region12
      $region11: #{_w8a8_qkvfc1_forward.3} parent=5 // pred_region
        %s155 = ssub.s32 %s12, 1
        // Predicated region
        $region13: #{_w8a8_qkvfc1_forward.3} parent=11 // pred_check
          %p156 = pneg %p59
        $region14: #{_w8a8_qkvfc1_forward.3} parent=11 // pred_check_branch
          %158 = sbr.rel (%p156) target = $region16
        $region15: #{_w8a8_qkvfc1_forward.3} parent=11 // pred_region
          %s159 = smul.u32 16, %s22
          %s160 = smul.u32 4, %s24
          %p161 = scmp.lt.s32.totalorder %s159, 15
          %s162 = scalar_select %p161, %s159, 15
          %p163 = scmp.lt.s32.totalorder %s160, 3
          %s164 = scalar_select %p163, %s160, 3
          %s165 = smul.addr %s162, 4
          %s166 = sadd.s32 %s164, %s165
          %s167 = smul.addr %s166, 4
          %s168 = scalar_lea.vmem %s0, %s167
          %s169 = smul.u32 16, %s22
          %s170 = smul.u32 4, %s24
        $region16: #{_w8a8_qkvfc1_forward.3} parent=11 // pred_fallthru
          _
      $region12: #{_w8a8_qkvfc1_forward.3} parent=5 // pred_fallthru
        _
      %p171 = scmp.lt.s32.totalorder %s12, 2
      // Predicated region
      $region17: #{_w8a8_qkvfc1_forward.3} parent=5 // pred_check
        %p172 = pneg %p171
      $region18: #{_w8a8_qkvfc1_forward.3} parent=5 // pred_check_branch
        %174 = sbr.rel (%p172) target = $region20
      $region19: #{_w8a8_qkvfc1_forward.3} parent=5 // pred_region
        // Predicated region
        $region21: #{_w8a8_qkvfc1_forward.3} parent=19 // pred_check
          %p175 = pneg %p81
        $region22: #{_w8a8_qkvfc1_forward.3} parent=19 // pred_check_branch
          %177 = sbr.rel (%p175) target = $region24
        $region23: #{_w8a8_qkvfc1_forward.3} parent=19 // pred_region
          %s178 = sand.u32 %s71, 1
          %s179 = scalar_lea.sflag [#allocation4], %s178
          %s180 = sand.u32 %s71, 1
          %s181 = smul.addr %s180, 1024
          %s182 = scalar_lea.vmem [#allocation3], %s181
          %s183 = smul.u32 64, %s21
          %s184 = smul.u32 4, %s20
          %s186 = ssub.s32 16384, 16384
          %187 = vsyncadd %s179, %s186
          %s188 = smul.addr %s183, 8
          %s189 = sadd.s32 %s184, %s188
          %s190 = smul.addr %s189, 64
          %s191 = scalar_lea.hbm %s1, %s190
          %s192 = sshll.u32 %s182, 4
          %s193 = int_to_ptr.vmem [resolvable:$true] %s192
          %198 = dma.hbm_to_vmem [thread:$0]  %s191, 16384, %s193, %s179, 512, 256, 16
        $region24: #{_w8a8_qkvfc1_forward.3} parent=19 // pred_fallthru
          _
        // Predicated region
        $region25: #{_w8a8_qkvfc1_forward.3} parent=19 // pred_check
          %p199 = pneg %p107
        $region26: #{_w8a8_qkvfc1_forward.3} parent=19 // pred_check_branch
          %201 = sbr.rel (%p199) target = $region28
        $region27: #{_w8a8_qkvfc1_forward.3} parent=19 // pred_region
          %s202 = smul.u32 4, %s20
          %p203 = scmp.lt.s32.totalorder %s202, 7
          %s204 = scalar_select %p203, %s202, 7
          %s205 = scalar_lea.vmem %s2, %s204
          %s206 = smul.u32 4, %s20
        $region28: #{_w8a8_qkvfc1_forward.3} parent=19 // pred_fallthru
          _
      $region20: #{_w8a8_qkvfc1_forward.3} parent=5 // pred_fallthru
        _
      %p207 = scmp.le.s32.totalorder 1, %s12
      %p208 = scmp.lt.s32.totalorder %s12, 3
      %p209 = pnand %p207, %p208
      %p210 = pneg %p209
      // Predicated region
      $region29: #{_w8a8_qkvfc1_forward.3} parent=5 // pred_check
        _
      $region30: #{_w8a8_qkvfc1_forward.3} parent=5 // pred_check_branch
        %212 = sbr.rel (%p209) target = $region32
      $region31: #{_w8a8_qkvfc1_forward.3} parent=5 // pred_region
        %s213 = ssub.s32 %s12, 1
        %s214 = sand.u32 %s74, 1
        %s215 = scalar_lea.sflag [#allocation4], %s214
        %s216 = sand.u32 %s74, 1
        %s217 = smul.addr %s216, 1024
        %s218 = scalar_lea.vmem [#allocation3], %s217
        // Predicated region
        $region33: #{_w8a8_qkvfc1_forward.3} parent=31 // pred_check
          %p219 = pneg %p87
        $region34: #{_w8a8_qkvfc1_forward.3} parent=31 // pred_check_branch
          %221 = sbr.rel (%p219) target = $region36
        $region35: #{_w8a8_qkvfc1_forward.3} parent=31 // pred_region
          %222 = dma.done %s215, 16384
        $region36: #{_w8a8_qkvfc1_forward.3} parent=31 // pred_fallthru
          _
        %s223 = smul.u32 16, %s22
        %s224 = smul.u32 4, %s24
        %p225 = scmp.lt.s32.totalorder %s223, 15
        %s226 = scalar_select %p225, %s223, 15
        %p227 = scmp.lt.s32.totalorder %s224, 3
        %s228 = scalar_select %p227, %s224, 3
        %s229 = smul.addr %s226, 4
        %s230 = sadd.s32 %s228, %s229
        %s231 = smul.addr %s230, 4
        %s232 = scalar_lea.vmem %s0, %s231
        %p233 = pneg %p59
        %p234 = pneg %p56
        %s235 = sand.u32 %s74, 1
        %s236 = scalar_lea.sflag [#allocation4], %s235
        %s237 = sand.u32 %s74, 1
        %s238 = smul.addr %s237, 1024
        %s239 = scalar_lea.vmem [#allocation3], %s238
        %p240 = pneg %p87
        %p241 = pneg %p84
        %s242 = smul.u32 4, %s23
        %p243 = scmp.lt.s32.totalorder %s242, 7
        %s244 = scalar_select %p243, %s242, 7
        %s245 = scalar_lea.vmem %s2, %s244
        %p246 = pneg %p113
        %p247 = pneg %p110
        %p248 = pneg %p141
        %p249 = pneg %p138
        %s250 = sand.u32 %s128, 1
        %s251 = sand.u32 %s128, 1
        %s252 = smul.addr %s251, 512
        %s253 = scalar_lea.vmem [#allocation5], %s252
        %s254 = smul.u32 16, %s22
        %s255 = smul.u32 4, %s24
        %p256 = scmp.lt.s32.totalorder %s254, 15
        %s257 = scalar_select %p256, %s254, 15
        %p258 = scmp.lt.s32.totalorder %s255, 3
        %s259 = scalar_select %p258, %s255, 3
        %s260 = smul.addr %s257, 4
        %s261 = sadd.s32 %s259, %s260
        %s262 = smul.addr %s261, 4
        %s263 = scalar_lea.vmem %s0, %s262
        %s264 = smul.u32 16, %s22
        %s265 = smul.u32 4, %s24
        %s266 = smul.u32 64, %s24
        %s267 = smul.u32 4, %s23
        %s268 = smul.u32 4, %s23
        %p269 = scmp.lt.s32.totalorder %s268, 7
        %s270 = scalar_select %p269, %s268, 7
        %s271 = scalar_lea.vmem %s2, %s270
        %s272 = smul.u32 4, %s23
        %s273 = smul.u32 16, %s22
        %s274 = smul.u32 4, %s23
        %p275 = scmp.eq.s32.totalorder %s24, 0
        // Predicated region
        $region37: #{_w8a8_qkvfc1_forward.3} parent=31 // pred_check
          %p276 = pneg %p275
        $region38: #{_w8a8_qkvfc1_forward.3} parent=31 // pred_check_branch
          %278 = sbr.rel (%p276) target = $region40
        $region39: #{_w8a8_qkvfc1_forward.3} parent=31 // pred_region
          %279 = vst [vmem:[#allocation2] sm:$0xff] 0.0
          %280 = vst [vmem:[#allocation2 + $0x8] sm:$0xff] 0.0
          %281 = vst [vmem:[#allocation2 + $0x10] sm:$0xff] 0.0
          %282 = vst [vmem:[#allocation2 + $0x18] sm:$0xff] 0.0
          %283 = vst [vmem:[#allocation2 + $0x20] sm:$0xff] 0.0
          %284 = vst [vmem:[#allocation2 + $0x28] sm:$0xff] 0.0
          %285 = vst [vmem:[#allocation2 + $0x30] sm:$0xff] 0.0
          %286 = vst [vmem:[#allocation2 + $0x38] sm:$0xff] 0.0
          %287 = vst [vmem:[#allocation2 + $0x40] sm:$0xff] 0.0
          %288 = vst [vmem:[#allocation2 + $0x48] sm:$0xff] 0.0
          %289 = vst [vmem:[#allocation2 + $0x50] sm:$0xff] 0.0
          %290 = vst [vmem:[#allocation2 + $0x58] sm:$0xff] 0.0
          %291 = vst [vmem:[#allocation2 + $0x60] sm:$0xff] 0.0
          %292 = vst [vmem:[#allocation2 + $0x68] sm:$0xff] 0.0
          %293 = vst [vmem:[#allocation2 + $0x70] sm:$0xff] 0.0
          %294 = vst [vmem:[#allocation2 + $0x78] sm:$0xff] 0.0
          %295 = vst [vmem:[#allocation2 + $0x80] sm:$0xff] 0.0
          %296 = vst [vmem:[#allocation2 + $0x88] sm:$0xff] 0.0
          %297 = vst [vmem:[#allocation2 + $0x90] sm:$0xff] 0.0
          %298 = vst [vmem:[#allocation2 + $0x98] sm:$0xff] 0.0
          %299 = vst [vmem:[#allocation2 + $0xa0] sm:$0xff] 0.0
          %300 = vst [vmem:[#allocation2 + $0xa8] sm:$0xff] 0.0
          %301 = vst [vmem:[#allocation2 + $0xb0] sm:$0xff] 0.0
          %302 = vst [vmem:[#allocation2 + $0xb8] sm:$0xff] 0.0
          %303 = vst [vmem:[#allocation2 + $0xc0] sm:$0xff] 0.0
          %304 = vst [vmem:[#allocation2 + $0xc8] sm:$0xff] 0.0
          %305 = vst [vmem:[#allocation2 + $0xd0] sm:$0xff] 0.0
          %306 = vst [vmem:[#allocation2 + $0xd8] sm:$0xff] 0.0
          %307 = vst [vmem:[#allocation2 + $0xe0] sm:$0xff] 0.0
          %308 = vst [vmem:[#allocation2 + $0xe8] sm:$0xff] 0.0
          %309 = vst [vmem:[#allocation2 + $0xf0] sm:$0xff] 0.0
          %310 = vst [vmem:[#allocation2 + $0xf8] sm:$0xff] 0.0
          %311 = vst [vmem:[#allocation2 + $0x100] sm:$0xff] 0.0
          %312 = vst [vmem:[#allocation2 + $0x108] sm:$0xff] 0.0
          %313 = vst [vmem:[#allocation2 + $0x110] sm:$0xff] 0.0
          %314 = vst [vmem:[#allocation2 + $0x118] sm:$0xff] 0.0
          %315 = vst [vmem:[#allocation2 + $0x120] sm:$0xff] 0.0
          %316 = vst [vmem:[#allocation2 + $0x128] sm:$0xff] 0.0
          %317 = vst [vmem:[#allocation2 + $0x130] sm:$0xff] 0.0
          %318 = vst [vmem:[#allocation2 + $0x138] sm:$0xff] 0.0
          %319 = vst [vmem:[#allocation2 + $0x140] sm:$0xff] 0.0
          %320 = vst [vmem:[#allocation2 + $0x148] sm:$0xff] 0.0
          %321 = vst [vmem:[#allocation2 + $0x150] sm:$0xff] 0.0
          %322 = vst [vmem:[#allocation2 + $0x158] sm:$0xff] 0.0
          %323 = vst [vmem:[#allocation2 + $0x160] sm:$0xff] 0.0
          %324 = vst [vmem:[#allocation2 + $0x168] sm:$0xff] 0.0
          %325 = vst [vmem:[#allocation2 + $0x170] sm:$0xff] 0.0
          %326 = vst [vmem:[#allocation2 + $0x178] sm:$0xff] 0.0
          %327 = vst [vmem:[#allocation2 + $0x180] sm:$0xff] 0.0
          %328 = vst [vmem:[#allocation2 + $0x188] sm:$0xff] 0.0
          %329 = vst [vmem:[#allocation2 + $0x190] sm:$0xff] 0.0
          %330 = vst [vmem:[#allocation2 + $0x198] sm:$0xff] 0.0
          %331 = vst [vmem:[#allocation2 + $0x1a0] sm:$0xff] 0.0
          %332 = vst [vmem:[#allocation2 + $0x1a8] sm:$0xff] 0.0
          %333 = vst [vmem:[#allocation2 + $0x1b0] sm:$0xff] 0.0
          %334 = vst [vmem:[#allocation2 + $0x1b8] sm:$0xff] 0.0
          %335 = vst [vmem:[#allocation2 + $0x1c0] sm:$0xff] 0.0
          %336 = vst [vmem:[#allocation2 + $0x1c8] sm:$0xff] 0.0
          %337 = vst [vmem:[#allocation2 + $0x1d0] sm:$0xff] 0.0
          %338 = vst [vmem:[#allocation2 + $0x1d8] sm:$0xff] 0.0
          %339 = vst [vmem:[#allocation2 + $0x1e0] sm:$0xff] 0.0
          %340 = vst [vmem:[#allocation2 + $0x1e8] sm:$0xff] 0.0
          %341 = vst [vmem:[#allocation2 + $0x1f0] sm:$0xff] 0.0
          %342 = vst [vmem:[#allocation2 + $0x1f8] sm:$0xff] 0.0
        $region40: #{_w8a8_qkvfc1_forward.3} parent=31 // pred_fallthru
          _
        %v343 = vld [vmem:[#allocation2] sm:$0xff]
        %v344 = vld [vmem:[#allocation2 + $0x8] sm:$0xff]
        %v345 = vld [vmem:[#allocation2 + $0x10] sm:$0xff]
        %v346 = vld [vmem:[#allocation2 + $0x18] sm:$0xff]
        %v347 = vld [vmem:[#allocation2 + $0x20] sm:$0xff]
        %v348 = vld [vmem:[#allocation2 + $0x28] sm:$0xff]
        %v349 = vld [vmem:[#allocation2 + $0x30] sm:$0xff]
        %v350 = vld [vmem:[#allocation2 + $0x38] sm:$0xff]
        %v351 = vld [vmem:[#allocation2 + $0x40] sm:$0xff]
        %v352 = vld [vmem:[#allocation2 + $0x48] sm:$0xff]
        %v353 = vld [vmem:[#allocation2 + $0x50] sm:$0xff]
        %v354 = vld [vmem:[#allocation2 + $0x58] sm:$0xff]
        %v355 = vld [vmem:[#allocation2 + $0x60] sm:$0xff]
        %v356 = vld [vmem:[#allocation2 + $0x68] sm:$0xff]
        %v357 = vld [vmem:[#allocation2 + $0x70] sm:$0xff]
        %v358 = vld [vmem:[#allocation2 + $0x78] sm:$0xff]
        %v359 = vld [vmem:[#allocation2 + $0x80] sm:$0xff]
        %v360 = vld [vmem:[#allocation2 + $0x88] sm:$0xff]
        %v361 = vld [vmem:[#allocation2 + $0x90] sm:$0xff]
        %v362 = vld [vmem:[#allocation2 + $0x98] sm:$0xff]
        %v363 = vld [vmem:[#allocation2 + $0xa0] sm:$0xff]
        %v364 = vld [vmem:[#allocation2 + $0xa8] sm:$0xff]
        %v365 = vld [vmem:[#allocation2 + $0xb0] sm:$0xff]
        %v366 = vld [vmem:[#allocation2 + $0xb8] sm:$0xff]
        %v367 = vld [vmem:[#allocation2 + $0xc0] sm:$0xff]
        %v368 = vld [vmem:[#allocation2 + $0xc8] sm:$0xff]
        %v369 = vld [vmem:[#allocation2 + $0xd0] sm:$0xff]
        %v370 = vld [vmem:[#allocation2 + $0xd8] sm:$0xff]
        %v371 = vld [vmem:[#allocation2 + $0xe0] sm:$0xff]
        %v372 = vld [vmem:[#allocation2 + $0xe8] sm:$0xff]
        %v373 = vld [vmem:[#allocation2 + $0xf0] sm:$0xff]
        %v374 = vld [vmem:[#allocation2 + $0xf8] sm:$0xff]
        %v375 = vld [vmem:[#allocation2 + $0x100] sm:$0xff]
        %v376 = vld [vmem:[#allocation2 + $0x108] sm:$0xff]
        %v377 = vld [vmem:[#allocation2 + $0x110] sm:$0xff]
        %v378 = vld [vmem:[#allocation2 + $0x118] sm:$0xff]
        %v379 = vld [vmem:[#allocation2 + $0x120] sm:$0xff]
        %v380 = vld [vmem:[#allocation2 + $0x128] sm:$0xff]
        %v381 = vld [vmem:[#allocation2 + $0x130] sm:$0xff]
        %v382 = vld [vmem:[#allocation2 + $0x138] sm:$0xff]
        %v383 = vld [vmem:[#allocation2 + $0x140] sm:$0xff]
        %v384 = vld [vmem:[#allocation2 + $0x148] sm:$0xff]
        %v385 = vld [vmem:[#allocation2 + $0x150] sm:$0xff]
        %v386 = vld [vmem:[#allocation2 + $0x158] sm:$0xff]
        %v387 = vld [vmem:[#allocation2 + $0x160] sm:$0xff]
        %v388 = vld [vmem:[#allocation2 + $0x168] sm:$0xff]
        %v389 = vld [vmem:[#allocation2 + $0x170] sm:$0xff]
        %v390 = vld [vmem:[#allocation2 + $0x178] sm:$0xff]
        %v391 = vld [vmem:[#allocation2 + $0x180] sm:$0xff]
        %v392 = vld [vmem:[#allocation2 + $0x188] sm:$0xff]
        %v393 = vld [vmem:[#allocation2 + $0x190] sm:$0xff]
        %v394 = vld [vmem:[#allocation2 + $0x198] sm:$0xff]
        %v395 = vld [vmem:[#allocation2 + $0x1a0] sm:$0xff]
        %v396 = vld [vmem:[#allocation2 + $0x1a8] sm:$0xff]
        %v397 = vld [vmem:[#allocation2 + $0x1b0] sm:$0xff]
        %v398 = vld [vmem:[#allocation2 + $0x1b8] sm:$0xff]
        %v399 = vld [vmem:[#allocation2 + $0x1c0] sm:$0xff]
        %v400 = vld [vmem:[#allocation2 + $0x1c8] sm:$0xff]
        %v401 = vld [vmem:[#allocation2 + $0x1d0] sm:$0xff]
        %v402 = vld [vmem:[#allocation2 + $0x1d8] sm:$0xff]
        %v403 = vld [vmem:[#allocation2 + $0x1e0] sm:$0xff]
        %v404 = vld [vmem:[#allocation2 + $0x1e8] sm:$0xff]
        %v405 = vld [vmem:[#allocation2 + $0x1f0] sm:$0xff]
        %v406 = vld [vmem:[#allocation2 + $0x1f8] sm:$0xff]
        %v407 = vld [vmem:[%s263] sm:$0xff]
        %v408 = vld [vmem:[%s263 + $0x8] sm:$0xff]
        %v409 = vld [vmem:[%s263 + $0x10] sm:$0xff]
        %v410 = vld [vmem:[%s263 + $0x18] sm:$0xff]
        %v411 = vld [vmem:[%s263 + $0x20] sm:$0xff]
        %v412 = vld [vmem:[%s263 + $0x28] sm:$0xff]
        %v413 = vld [vmem:[%s263 + $0x30] sm:$0xff]
        %v414 = vld [vmem:[%s263 + $0x38] sm:$0xff]
        %v415 = vld [vmem:[%s263 + $0x40] sm:$0xff]
        %v416 = vld [vmem:[%s263 + $0x48] sm:$0xff]
        %v417 = vld [vmem:[%s263 + $0x50] sm:$0xff]
        %v418 = vld [vmem:[%s263 + $0x58] sm:$0xff]
        %v419 = vld [vmem:[%s263 + $0x60] sm:$0xff]
        %v420 = vld [vmem:[%s263 + $0x68] sm:$0xff]
        %v421 = vld [vmem:[%s263 + $0x70] sm:$0xff]
        %v422 = vld [vmem:[%s263 + $0x78] sm:$0xff]
        %v423 = vld [vmem:[%s263 + $0x80] sm:$0xff]
        %v424 = vld [vmem:[%s263 + $0x88] sm:$0xff]
        %v425 = vld [vmem:[%s263 + $0x90] sm:$0xff]
        %v426 = vld [vmem:[%s263 + $0x98] sm:$0xff]
        %v427 = vld [vmem:[%s263 + $0xa0] sm:$0xff]
        %v428 = vld [vmem:[%s263 + $0xa8] sm:$0xff]
        %v429 = vld [vmem:[%s263 + $0xb0] sm:$0xff]
        %v430 = vld [vmem:[%s263 + $0xb8] sm:$0xff]
        %v431 = vld [vmem:[%s263 + $0xc0] sm:$0xff]
        %v432 = vld [vmem:[%s263 + $0xc8] sm:$0xff]
        %v433 = vld [vmem:[%s263 + $0xd0] sm:$0xff]
        %v434 = vld [vmem:[%s263 + $0xd8] sm:$0xff]
        %v435 = vld [vmem:[%s263 + $0xe0] sm:$0xff]
        %v436 = vld [vmem:[%s263 + $0xe8] sm:$0xff]
        %v437 = vld [vmem:[%s263 + $0xf0] sm:$0xff]
        %v438 = vld [vmem:[%s263 + $0xf8] sm:$0xff]
        %v439 = vld [vmem:[%s218] sm:$0xff]
        %v440 = vld [vmem:[%s218 + $0x8] sm:$0xff]
        %v441 = vld [vmem:[%s218 + $0x10] sm:$0xff]
        %v442 = vld [vmem:[%s218 + $0x18] sm:$0xff]
        %v443 = vld [vmem:[%s218 + $0x20] sm:$0xff]
        %v444 = vld [vmem:[%s218 + $0x28] sm:$0xff]
        %v445 = vld [vmem:[%s218 + $0x30] sm:$0xff]
        %v446 = vld [vmem:[%s218 + $0x38] sm:$0xff]
        %v447 = vld [vmem:[%s218 + $0x40] sm:$0xff]
        %v448 = vld [vmem:[%s218 + $0x48] sm:$0xff]
        %v449 = vld [vmem:[%s218 + $0x50] sm:$0xff]
        %v450 = vld [vmem:[%s218 + $0x58] sm:$0xff]
        %v451 = vld [vmem:[%s218 + $0x60] sm:$0xff]
        %v452 = vld [vmem:[%s218 + $0x68] sm:$0xff]
        %v453 = vld [vmem:[%s218 + $0x70] sm:$0xff]
        %v454 = vld [vmem:[%s218 + $0x78] sm:$0xff]
        %v455 = vld [vmem:[%s218 + $0x80] sm:$0xff]
        %v456 = vld [vmem:[%s218 + $0x88] sm:$0xff]
        %v457 = vld [vmem:[%s218 + $0x90] sm:$0xff]
        %v458 = vld [vmem:[%s218 + $0x98] sm:$0xff]
        %v459 = vld [vmem:[%s218 + $0xa0] sm:$0xff]
        %v460 = vld [vmem:[%s218 + $0xa8] sm:$0xff]
        %v461 = vld [vmem:[%s218 + $0xb0] sm:$0xff]
        %v462 = vld [vmem:[%s218 + $0xb8] sm:$0xff]
        %v463 = vld [vmem:[%s218 + $0xc0] sm:$0xff]
        %v464 = vld [vmem:[%s218 + $0xc8] sm:$0xff]
        %v465 = vld [vmem:[%s218 + $0xd0] sm:$0xff]
        %v466 = vld [vmem:[%s218 + $0xd8] sm:$0xff]
        %v467 = vld [vmem:[%s218 + $0xe0] sm:$0xff]
        %v468 = vld [vmem:[%s218 + $0xe8] sm:$0xff]
        %v469 = vld [vmem:[%s218 + $0xf0] sm:$0xff]
        %v470 = vld [vmem:[%s218 + $0xf8] sm:$0xff]
        %v471 = vld [vmem:[%s218 + $0x100] sm:$0xff]
        %v472 = vld [vmem:[%s218 + $0x108] sm:$0xff]
        %v473 = vld [vmem:[%s218 + $0x110] sm:$0xff]
        %v474 = vld [vmem:[%s218 + $0x118] sm:$0xff]
        %v475 = vld [vmem:[%s218 + $0x120] sm:$0xff]
        %v476 = vld [vmem:[%s218 + $0x128] sm:$0xff]
        %v477 = vld [vmem:[%s218 + $0x130] sm:$0xff]
        %v478 = vld [vmem:[%s218 + $0x138] sm:$0xff]
        %v479 = vld [vmem:[%s218 + $0x140] sm:$0xff]
        %v480 = vld [vmem:[%s218 + $0x148] sm:$0xff]
        %v481 = vld [vmem:[%s218 + $0x150] sm:$0xff]
        %v482 = vld [vmem:[%s218 + $0x158] sm:$0xff]
        %v483 = vld [vmem:[%s218 + $0x160] sm:$0xff]
        %v484 = vld [vmem:[%s218 + $0x168] sm:$0xff]
        %v485 = vld [vmem:[%s218 + $0x170] sm:$0xff]
        %v486 = vld [vmem:[%s218 + $0x178] sm:$0xff]
        %v487 = vld [vmem:[%s218 + $0x180] sm:$0xff]
        %v488 = vld [vmem:[%s218 + $0x188] sm:$0xff]
        %v489 = vld [vmem:[%s218 + $0x190] sm:$0xff]
        %v490 = vld [vmem:[%s218 + $0x198] sm:$0xff]
        %v491 = vld [vmem:[%s218 + $0x1a0] sm:$0xff]
        %v492 = vld [vmem:[%s218 + $0x1a8] sm:$0xff]
        %v493 = vld [vmem:[%s218 + $0x1b0] sm:$0xff]
        %v494 = vld [vmem:[%s218 + $0x1b8] sm:$0xff]
        %v495 = vld [vmem:[%s218 + $0x1c0] sm:$0xff]
        %v496 = vld [vmem:[%s218 + $0x1c8] sm:$0xff]
        %v497 = vld [vmem:[%s218 + $0x1d0] sm:$0xff]
        %v498 = vld [vmem:[%s218 + $0x1d8] sm:$0xff]
        %v499 = vld [vmem:[%s218 + $0x1e0] sm:$0xff]
        %v500 = vld [vmem:[%s218 + $0x1e8] sm:$0xff]
        %v501 = vld [vmem:[%s218 + $0x1f0] sm:$0xff]
        %v502 = vld [vmem:[%s218 + $0x1f8] sm:$0xff]
        %v503 = vld [vmem:[%s218 + $0x200] sm:$0xff]
        %v504 = vld [vmem:[%s218 + $0x208] sm:$0xff]
        %v505 = vld [vmem:[%s218 + $0x210] sm:$0xff]
        %v506 = vld [vmem:[%s218 + $0x218] sm:$0xff]
        %v507 = vld [vmem:[%s218 + $0x220] sm:$0xff]
        %v508 = vld [vmem:[%s218 + $0x228] sm:$0xff]
        %v509 = vld [vmem:[%s218 + $0x230] sm:$0xff]
        %v510 = vld [vmem:[%s218 + $0x238] sm:$0xff]
        %v511 = vld [vmem:[%s218 + $0x240] sm:$0xff]
        %v512 = vld [vmem:[%s218 + $0x248] sm:$0xff]
        %v513 = vld [vmem:[%s218 + $0x250] sm:$0xff]
        %v514 = vld [vmem:[%s218 + $0x258] sm:$0xff]
        %v515 = vld [vmem:[%s218 + $0x260] sm:$0xff]
        %v516 = vld [vmem:[%s218 + $0x268] sm:$0xff]
        %v517 = vld [vmem:[%s218 + $0x270] sm:$0xff]
        %v518 = vld [vmem:[%s218 + $0x278] sm:$0xff]
        %v519 = vld [vmem:[%s218 + $0x280] sm:$0xff]
        %v520 = vld [vmem:[%s218 + $0x288] sm:$0xff]
        %v521 = vld [vmem:[%s218 + $0x290] sm:$0xff]
        %v522 = vld [vmem:[%s218 + $0x298] sm:$0xff]
        %v523 = vld [vmem:[%s218 + $0x2a0] sm:$0xff]
        %v524 = vld [vmem:[%s218 + $0x2a8] sm:$0xff]
        %v525 = vld [vmem:[%s218 + $0x2b0] sm:$0xff]
        %v526 = vld [vmem:[%s218 + $0x2b8] sm:$0xff]
        %v527 = vld [vmem:[%s218 + $0x2c0] sm:$0xff]
        %v528 = vld [vmem:[%s218 + $0x2c8] sm:$0xff]
        %v529 = vld [vmem:[%s218 + $0x2d0] sm:$0xff]
        %v530 = vld [vmem:[%s218 + $0x2d8] sm:$0xff]
        %v531 = vld [vmem:[%s218 + $0x2e0] sm:$0xff]
        %v532 = vld [vmem:[%s218 + $0x2e8] sm:$0xff]
        %v533 = vld [vmem:[%s218 + $0x2f0] sm:$0xff]
        %v534 = vld [vmem:[%s218 + $0x2f8] sm:$0xff]
        %v535 = vld [vmem:[%s218 + $0x300] sm:$0xff]
        %v536 = vld [vmem:[%s218 + $0x308] sm:$0xff]
        %v537 = vld [vmem:[%s218 + $0x310] sm:$0xff]
        %v538 = vld [vmem:[%s218 + $0x318] sm:$0xff]
        %v539 = vld [vmem:[%s218 + $0x320] sm:$0xff]
        %v540 = vld [vmem:[%s218 + $0x328] sm:$0xff]
        %v541 = vld [vmem:[%s218 + $0x330] sm:$0xff]
        %v542 = vld [vmem:[%s218 + $0x338] sm:$0xff]
        %v543 = vld [vmem:[%s218 + $0x340] sm:$0xff]
        %v544 = vld [vmem:[%s218 + $0x348] sm:$0xff]
        %v545 = vld [vmem:[%s218 + $0x350] sm:$0xff]
        %v546 = vld [vmem:[%s218 + $0x358] sm:$0xff]
        %v547 = vld [vmem:[%s218 + $0x360] sm:$0xff]
        %v548 = vld [vmem:[%s218 + $0x368] sm:$0xff]
        %v549 = vld [vmem:[%s218 + $0x370] sm:$0xff]
        %v550 = vld [vmem:[%s218 + $0x378] sm:$0xff]
        %v551 = vld [vmem:[%s218 + $0x380] sm:$0xff]
        %v552 = vld [vmem:[%s218 + $0x388] sm:$0xff]
        %v553 = vld [vmem:[%s218 + $0x390] sm:$0xff]
        %v554 = vld [vmem:[%s218 + $0x398] sm:$0xff]
        %v555 = vld [vmem:[%s218 + $0x3a0] sm:$0xff]
        %v556 = vld [vmem:[%s218 + $0x3a8] sm:$0xff]
        %v557 = vld [vmem:[%s218 + $0x3b0] sm:$0xff]
        %v558 = vld [vmem:[%s218 + $0x3b8] sm:$0xff]
        %v559 = vld [vmem:[%s218 + $0x3c0] sm:$0xff]
        %v560 = vld [vmem:[%s218 + $0x3c8] sm:$0xff]
        %v561 = vld [vmem:[%s218 + $0x3d0] sm:$0xff]
        %v562 = vld [vmem:[%s218 + $0x3d8] sm:$0xff]
        %v563 = vld [vmem:[%s218 + $0x3e0] sm:$0xff]
        %v564 = vld [vmem:[%s218 + $0x3e8] sm:$0xff]
        %v565 = vld [vmem:[%s218 + $0x3f0] sm:$0xff]
        %v566 = vld [vmem:[%s218 + $0x3f8] sm:$0xff]
        %v599 = vunpack.c.l.b16 %v407
        %v600 = vunpack.c.h.b16 %v407
        %v601 = vunpack.c.l.b16 %v408
        %v602 = vunpack.c.h.b16 %v408
        %v603 = vunpack.c.l.b16 %v409
        %v604 = vunpack.c.h.b16 %v409
        %v605 = vunpack.c.l.b16 %v410
        %v606 = vunpack.c.h.b16 %v410
        %v607 = vunpack.c.l.b16 %v411
        %v608 = vunpack.c.h.b16 %v411
        %v609 = vunpack.c.l.b16 %v412
        %v610 = vunpack.c.h.b16 %v412
        %v611 = vunpack.c.l.b16 %v413
        %v612 = vunpack.c.h.b16 %v413
        %v613 = vunpack.c.l.b16 %v414
        %v614 = vunpack.c.h.b16 %v414
        %v615 = vunpack.c.l.b16 %v415
        %v616 = vunpack.c.h.b16 %v415
        %v617 = vunpack.c.l.b16 %v416
        %v618 = vunpack.c.h.b16 %v416
        %v619 = vunpack.c.l.b16 %v417
        %v620 = vunpack.c.h.b16 %v417
        %v621 = vunpack.c.l.b16 %v418
        %v622 = vunpack.c.h.b16 %v418
        %v623 = vunpack.c.l.b16 %v419
        %v624 = vunpack.c.h.b16 %v419
        %v625 = vunpack.c.l.b16 %v420
        %v626 = vunpack.c.h.b16 %v420
        %v627 = vunpack.c.l.b16 %v421
        %v628 = vunpack.c.h.b16 %v421
        %v629 = vunpack.c.l.b16 %v422
        %v630 = vunpack.c.h.b16 %v422
        %v631 = vunpack.c.l.b16 %v423
        %v632 = vunpack.c.h.b16 %v423
        %v633 = vunpack.c.l.b16 %v424
        %v634 = vunpack.c.h.b16 %v424
        %v635 = vunpack.c.l.b16 %v425
        %v636 = vunpack.c.h.b16 %v425
        %v637 = vunpack.c.l.b16 %v426
        %v638 = vunpack.c.h.b16 %v426
        %v639 = vunpack.c.l.b16 %v427
        %v640 = vunpack.c.h.b16 %v427
        %v641 = vunpack.c.l.b16 %v428
        %v642 = vunpack.c.h.b16 %v428
        %v643 = vunpack.c.l.b16 %v429
        %v644 = vunpack.c.h.b16 %v429
        %v645 = vunpack.c.l.b16 %v430
        %v646 = vunpack.c.h.b16 %v430
        %v647 = vunpack.c.l.b16 %v431
        %v648 = vunpack.c.h.b16 %v431
        %v649 = vunpack.c.l.b16 %v432
        %v650 = vunpack.c.h.b16 %v432
        %v651 = vunpack.c.l.b16 %v433
        %v652 = vunpack.c.h.b16 %v433
        %v653 = vunpack.c.l.b16 %v434
        %v654 = vunpack.c.h.b16 %v434
        %v655 = vunpack.c.l.b16 %v435
        %v656 = vunpack.c.h.b16 %v435
        %v657 = vunpack.c.l.b16 %v436
        %v658 = vunpack.c.h.b16 %v436
        %v659 = vunpack.c.l.b16 %v437
        %v660 = vunpack.c.h.b16 %v437
        %v661 = vunpack.c.l.b16 %v438
        %v662 = vunpack.c.h.b16 %v438
        %v663 = vpack.c.b16 %v603, %v599
        %v664 = vpack.c.b16 %v604, %v600
        %v665 = vpack.c.b16 %v605, %v601
        %v666 = vpack.c.b16 %v606, %v602
        %v667 = vpack.c.b16 %v611, %v607
        %v668 = vpack.c.b16 %v612, %v608
        %v669 = vpack.c.b16 %v613, %v609
        %v670 = vpack.c.b16 %v614, %v610
        %v671 = vpack.c.b16 %v619, %v615
        %v672 = vpack.c.b16 %v620, %v616
        %v673 = vpack.c.b16 %v621, %v617
        %v674 = vpack.c.b16 %v622, %v618
        %v675 = vpack.c.b16 %v627, %v623
        %v676 = vpack.c.b16 %v628, %v624
        %v677 = vpack.c.b16 %v629, %v625
        %v678 = vpack.c.b16 %v630, %v626
        %v679 = vpack.c.b16 %v635, %v631
        %v680 = vpack.c.b16 %v636, %v632
        %v681 = vpack.c.b16 %v637, %v633
        %v682 = vpack.c.b16 %v638, %v634
        %v683 = vpack.c.b16 %v643, %v639
        %v684 = vpack.c.b16 %v644, %v640
        %v685 = vpack.c.b16 %v645, %v641
        %v686 = vpack.c.b16 %v646, %v642
        %v687 = vpack.c.b16 %v651, %v647
        %v688 = vpack.c.b16 %v652, %v648
        %v689 = vpack.c.b16 %v653, %v649
        %v690 = vpack.c.b16 %v654, %v650
        %v691 = vpack.c.b16 %v659, %v655
        %v692 = vpack.c.b16 %v660, %v656
        %v693 = vpack.c.b16 %v661, %v657
        %v694 = vpack.c.b16 %v662, %v658
        %v855 = vunpack.c.l.b16 %v439
        %v856 = vunpack.c.h.b16 %v439
        %v857 = vunpack.c.l.b16 %v440
        %v858 = vunpack.c.h.b16 %v440
        %v859 = vunpack.c.l.b16 %v441
        %v860 = vunpack.c.h.b16 %v441
        %v861 = vunpack.c.l.b16 %v442
        %v862 = vunpack.c.h.b16 %v442
        %v863 = vunpack.c.l.b16 %v443
        %v864 = vunpack.c.h.b16 %v443
        %v865 = vunpack.c.l.b16 %v444
        %v866 = vunpack.c.h.b16 %v444
        %v867 = vunpack.c.l.b16 %v445
        %v868 = vunpack.c.h.b16 %v445
        %v869 = vunpack.c.l.b16 %v446
        %v870 = vunpack.c.h.b16 %v446
        %v871 = vunpack.c.l.b16 %v447
        %v872 = vunpack.c.h.b16 %v447
        %v873 = vunpack.c.l.b16 %v448
        %v874 = vunpack.c.h.b16 %v448
        %v875 = vunpack.c.l.b16 %v449
        %v876 = vunpack.c.h.b16 %v449
        %v877 = vunpack.c.l.b16 %v450
        %v878 = vunpack.c.h.b16 %v450
        %v879 = vunpack.c.l.b16 %v451
        %v880 = vunpack.c.h.b16 %v451
        %v881 = vunpack.c.l.b16 %v452
        %v882 = vunpack.c.h.b16 %v452
        %v883 = vunpack.c.l.b16 %v453
        %v884 = vunpack.c.h.b16 %v453
        %v885 = vunpack.c.l.b16 %v454
        %v886 = vunpack.c.h.b16 %v454
        %v887 = vunpack.c.l.b16 %v455
        %v888 = vunpack.c.h.b16 %v455
        %v889 = vunpack.c.l.b16 %v456
        %v890 = vunpack.c.h.b16 %v456
        %v891 = vunpack.c.l.b16 %v457
        %v892 = vunpack.c.h.b16 %v457
        %v893 = vunpack.c.l.b16 %v458
        %v894 = vunpack.c.h.b16 %v458
        %v895 = vunpack.c.l.b16 %v459
        %v896 = vunpack.c.h.b16 %v459
        %v897 = vunpack.c.l.b16 %v460
        %v898 = vunpack.c.h.b16 %v460
        %v899 = vunpack.c.l.b16 %v461
        %v900 = vunpack.c.h.b16 %v461
        %v901 = vunpack.c.l.b16 %v462
        %v902 = vunpack.c.h.b16 %v462
        %v903 = vunpack.c.l.b16 %v463
        %v904 = vunpack.c.h.b16 %v463
        %v905 = vunpack.c.l.b16 %v464
        %v906 = vunpack.c.h.b16 %v464
        %v907 = vunpack.c.l.b16 %v465
        %v908 = vunpack.c.h.b16 %v465
        %v909 = vunpack.c.l.b16 %v466
        %v910 = vunpack.c.h.b16 %v466
        %v911 = vunpack.c.l.b16 %v467
        %v912 = vunpack.c.h.b16 %v467
        %v913 = vunpack.c.l.b16 %v468
        %v914 = vunpack.c.h.b16 %v468
        %v915 = vunpack.c.l.b16 %v469
        %v916 = vunpack.c.h.b16 %v469
        %v917 = vunpack.c.l.b16 %v470
        %v918 = vunpack.c.h.b16 %v470
        %v919 = vunpack.c.l.b16 %v471
        %v920 = vunpack.c.h.b16 %v471
        %v921 = vunpack.c.l.b16 %v472
        %v922 = vunpack.c.h.b16 %v472
        %v923 = vunpack.c.l.b16 %v473
        %v924 = vunpack.c.h.b16 %v473
        %v925 = vunpack.c.l.b16 %v474
        %v926 = vunpack.c.h.b16 %v474
        %v927 = vunpack.c.l.b16 %v475
        %v928 = vunpack.c.h.b16 %v475
        %v929 = vunpack.c.l.b16 %v476
        %v930 = vunpack.c.h.b16 %v476
        %v931 = vunpack.c.l.b16 %v477
        %v932 = vunpack.c.h.b16 %v477
        %v933 = vunpack.c.l.b16 %v478
        %v934 = vunpack.c.h.b16 %v478
        %v935 = vunpack.c.l.b16 %v479
        %v936 = vunpack.c.h.b16 %v479
        %v937 = vunpack.c.l.b16 %v480
        %v938 = vunpack.c.h.b16 %v480
        %v939 = vunpack.c.l.b16 %v481
        %v940 = vunpack.c.h.b16 %v481
        %v941 = vunpack.c.l.b16 %v482
        %v942 = vunpack.c.h.b16 %v482
        %v943 = vunpack.c.l.b16 %v483
        %v944 = vunpack.c.h.b16 %v483
        %v945 = vunpack.c.l.b16 %v484
        %v946 = vunpack.c.h.b16 %v484
        %v947 = vunpack.c.l.b16 %v485
        %v948 = vunpack.c.h.b16 %v485
        %v949 = vunpack.c.l.b16 %v486
        %v950 = vunpack.c.h.b16 %v486
        %v951 = vunpack.c.l.b16 %v487
        %v952 = vunpack.c.h.b16 %v487
        %v953 = vunpack.c.l.b16 %v488
        %v954 = vunpack.c.h.b16 %v488
        %v955 = vunpack.c.l.b16 %v489
        %v956 = vunpack.c.h.b16 %v489
        %v957 = vunpack.c.l.b16 %v490
        %v958 = vunpack.c.h.b16 %v490
        %v959 = vunpack.c.l.b16 %v491
        %v960 = vunpack.c.h.b16 %v491
        %v961 = vunpack.c.l.b16 %v492
        %v962 = vunpack.c.h.b16 %v492
        %v963 = vunpack.c.l.b16 %v493
        %v964 = vunpack.c.h.b16 %v493
        %v965 = vunpack.c.l.b16 %v494
        %v966 = vunpack.c.h.b16 %v494
        %v967 = vunpack.c.l.b16 %v495
        %v968 = vunpack.c.h.b16 %v495
        %v969 = vunpack.c.l.b16 %v496
        %v970 = vunpack.c.h.b16 %v496
        %v971 = vunpack.c.l.b16 %v497
        %v972 = vunpack.c.h.b16 %v497
        %v973 = vunpack.c.l.b16 %v498
        %v974 = vunpack.c.h.b16 %v498
        %v975 = vunpack.c.l.b16 %v499
        %v976 = vunpack.c.h.b16 %v499
        %v977 = vunpack.c.l.b16 %v500
        %v978 = vunpack.c.h.b16 %v500
        %v979 = vunpack.c.l.b16 %v501
        %v980 = vunpack.c.h.b16 %v501
        %v981 = vunpack.c.l.b16 %v502
        %v982 = vunpack.c.h.b16 %v502
        %v983 = vunpack.c.l.b16 %v503
        %v984 = vunpack.c.h.b16 %v503
        %v985 = vunpack.c.l.b16 %v504
        %v986 = vunpack.c.h.b16 %v504
        %v987 = vunpack.c.l.b16 %v505
        %v988 = vunpack.c.h.b16 %v505
        %v989 = vunpack.c.l.b16 %v506
        %v990 = vunpack.c.h.b16 %v506
        %v991 = vunpack.c.l.b16 %v507
        %v992 = vunpack.c.h.b16 %v507
        %v993 = vunpack.c.l.b16 %v508
        %v994 = vunpack.c.h.b16 %v508
        %v995 = vunpack.c.l.b16 %v509
        %v996 = vunpack.c.h.b16 %v509
        %v997 = vunpack.c.l.b16 %v510
        %v998 = vunpack.c.h.b16 %v510
        %v999 = vunpack.c.l.b16 %v511
        %v1000 = vunpack.c.h.b16 %v511
        %v1001 = vunpack.c.l.b16 %v512
        %v1002 = vunpack.c.h.b16 %v512
        %v1003 = vunpack.c.l.b16 %v513
        %v1004 = vunpack.c.h.b16 %v513
        %v1005 = vunpack.c.l.b16 %v514
        %v1006 = vunpack.c.h.b16 %v514
        %v1007 = vunpack.c.l.b16 %v515
        %v1008 = vunpack.c.h.b16 %v515
        %v1009 = vunpack.c.l.b16 %v516
        %v1010 = vunpack.c.h.b16 %v516
        %v1011 = vunpack.c.l.b16 %v517
        %v1012 = vunpack.c.h.b16 %v517
        %v1013 = vunpack.c.l.b16 %v518
        %v1014 = vunpack.c.h.b16 %v518
        %v1015 = vunpack.c.l.b16 %v519
        %v1016 = vunpack.c.h.b16 %v519
        %v1017 = vunpack.c.l.b16 %v520
        %v1018 = vunpack.c.h.b16 %v520
        %v1019 = vunpack.c.l.b16 %v521
        %v1020 = vunpack.c.h.b16 %v521
        %v1021 = vunpack.c.l.b16 %v522
        %v1022 = vunpack.c.h.b16 %v522
        %v1023 = vunpack.c.l.b16 %v523
        %v1024 = vunpack.c.h.b16 %v523
        %v1025 = vunpack.c.l.b16 %v524
        %v1026 = vunpack.c.h.b16 %v524
        %v1027 = vunpack.c.l.b16 %v525
        %v1028 = vunpack.c.h.b16 %v525
        %v1029 = vunpack.c.l.b16 %v526
        %v1030 = vunpack.c.h.b16 %v526
        %v1031 = vunpack.c.l.b16 %v527
        %v1032 = vunpack.c.h.b16 %v527
        %v1033 = vunpack.c.l.b16 %v528
        %v1034 = vunpack.c.h.b16 %v528
        %v1035 = vunpack.c.l.b16 %v529
        %v1036 = vunpack.c.h.b16 %v529
        %v1037 = vunpack.c.l.b16 %v530
        %v1038 = vunpack.c.h.b16 %v530
        %v1039 = vunpack.c.l.b16 %v531
        %v1040 = vunpack.c.h.b16 %v531
        %v1041 = vunpack.c.l.b16 %v532
        %v1042 = vunpack.c.h.b16 %v532
        %v1043 = vunpack.c.l.b16 %v533
        %v1044 = vunpack.c.h.b16 %v533
        %v1045 = vunpack.c.l.b16 %v534
        %v1046 = vunpack.c.h.b16 %v534
        %v1047 = vunpack.c.l.b16 %v535
        %v1048 = vunpack.c.h.b16 %v535
        %v1049 = vunpack.c.l.b16 %v536
        %v1050 = vunpack.c.h.b16 %v536
        %v1051 = vunpack.c.l.b16 %v537
        %v1052 = vunpack.c.h.b16 %v537
        %v1053 = vunpack.c.l.b16 %v538
        %v1054 = vunpack.c.h.b16 %v538
        %v1055 = vunpack.c.l.b16 %v539
        %v1056 = vunpack.c.h.b16 %v539
        %v1057 = vunpack.c.l.b16 %v540
        %v1058 = vunpack.c.h.b16 %v540
        %v1059 = vunpack.c.l.b16 %v541
        %v1060 = vunpack.c.h.b16 %v541
        %v1061 = vunpack.c.l.b16 %v542
        %v1062 = vunpack.c.h.b16 %v542
        %v1063 = vunpack.c.l.b16 %v543
        %v1064 = vunpack.c.h.b16 %v543
        %v1065 = vunpack.c.l.b16 %v544
        %v1066 = vunpack.c.h.b16 %v544
        %v1067 = vunpack.c.l.b16 %v545
        %v1068 = vunpack.c.h.b16 %v545
        %v1069 = vunpack.c.l.b16 %v546
        %v1070 = vunpack.c.h.b16 %v546
        %v1071 = vunpack.c.l.b16 %v547
        %v1072 = vunpack.c.h.b16 %v547
        %v1073 = vunpack.c.l.b16 %v548
        %v1074 = vunpack.c.h.b16 %v548
        %v1075 = vunpack.c.l.b16 %v549
        %v1076 = vunpack.c.h.b16 %v549
        %v1077 = vunpack.c.l.b16 %v550
        %v1078 = vunpack.c.h.b16 %v550
        %v1079 = vunpack.c.l.b16 %v551
        %v1080 = vunpack.c.h.b16 %v551
        %v1081 = vunpack.c.l.b16 %v552
        %v1082 = vunpack.c.h.b16 %v552
        %v1083 = vunpack.c.l.b16 %v553
        %v1084 = vunpack.c.h.b16 %v553
        %v1085 = vunpack.c.l.b16 %v554
        %v1086 = vunpack.c.h.b16 %v554
        %v1087 = vunpack.c.l.b16 %v555
        %v1088 = vunpack.c.h.b16 %v555
        %v1089 = vunpack.c.l.b16 %v556
        %v1090 = vunpack.c.h.b16 %v556
        %v1091 = vunpack.c.l.b16 %v557
        %v1092 = vunpack.c.h.b16 %v557
        %v1093 = vunpack.c.l.b16 %v558
        %v1094 = vunpack.c.h.b16 %v558
        %v1095 = vunpack.c.l.b16 %v559
        %v1096 = vunpack.c.h.b16 %v559
        %v1097 = vunpack.c.l.b16 %v560
        %v1098 = vunpack.c.h.b16 %v560
        %v1099 = vunpack.c.l.b16 %v561
        %v1100 = vunpack.c.h.b16 %v561
        %v1101 = vunpack.c.l.b16 %v562
        %v1102 = vunpack.c.h.b16 %v562
        %v1103 = vunpack.c.l.b16 %v563
        %v1104 = vunpack.c.h.b16 %v563
        %v1105 = vunpack.c.l.b16 %v564
        %v1106 = vunpack.c.h.b16 %v564
        %v1107 = vunpack.c.l.b16 %v565
        %v1108 = vunpack.c.h.b16 %v565
        %v1109 = vunpack.c.l.b16 %v566
        %v1110 = vunpack.c.h.b16 %v566
        %v1111 = vpack.c.b16 %v859, %v855
        %v1112 = vpack.c.b16 %v860, %v856
        %v1113 = vpack.c.b16 %v861, %v857
        %v1114 = vpack.c.b16 %v862, %v858
        %v1115 = vpack.c.b16 %v867, %v863
        %v1116 = vpack.c.b16 %v868, %v864
        %v1117 = vpack.c.b16 %v869, %v865
        %v1118 = vpack.c.b16 %v870, %v866
        %v1119 = vpack.c.b16 %v875, %v871
        %v1120 = vpack.c.b16 %v876, %v872
        %v1121 = vpack.c.b16 %v877, %v873
        %v1122 = vpack.c.b16 %v878, %v874
        %v1123 = vpack.c.b16 %v883, %v879
        %v1124 = vpack.c.b16 %v884, %v880
        %v1125 = vpack.c.b16 %v885, %v881
        %v1126 = vpack.c.b16 %v886, %v882
        %v1127 = vpack.c.b16 %v891, %v887
        %v1128 = vpack.c.b16 %v892, %v888
        %v1129 = vpack.c.b16 %v893, %v889
        %v1130 = vpack.c.b16 %v894, %v890
        %v1131 = vpack.c.b16 %v899, %v895
        %v1132 = vpack.c.b16 %v900, %v896
        %v1133 = vpack.c.b16 %v901, %v897
        %v1134 = vpack.c.b16 %v902, %v898
        %v1135 = vpack.c.b16 %v907, %v903
        %v1136 = vpack.c.b16 %v908, %v904
        %v1137 = vpack.c.b16 %v909, %v905
        %v1138 = vpack.c.b16 %v910, %v906
        %v1139 = vpack.c.b16 %v915, %v911
        %v1140 = vpack.c.b16 %v916, %v912
        %v1141 = vpack.c.b16 %v917, %v913
        %v1142 = vpack.c.b16 %v918, %v914
        %v1143 = vpack.c.b16 %v923, %v919
        %v1144 = vpack.c.b16 %v924, %v920
        %v1145 = vpack.c.b16 %v925, %v921
        %v1146 = vpack.c.b16 %v926, %v922
        %v1147 = vpack.c.b16 %v931, %v927
        %v1148 = vpack.c.b16 %v932, %v928
        %v1149 = vpack.c.b16 %v933, %v929
        %v1150 = vpack.c.b16 %v934, %v930
        %v1151 = vpack.c.b16 %v939, %v935
        %v1152 = vpack.c.b16 %v940, %v936
        %v1153 = vpack.c.b16 %v941, %v937
        %v1154 = vpack.c.b16 %v942, %v938
        %v1155 = vpack.c.b16 %v947, %v943
        %v1156 = vpack.c.b16 %v948, %v944
        %v1157 = vpack.c.b16 %v949, %v945
        %v1158 = vpack.c.b16 %v950, %v946
        %v1159 = vpack.c.b16 %v955, %v951
        %v1160 = vpack.c.b16 %v956, %v952
        %v1161 = vpack.c.b16 %v957, %v953
        %v1162 = vpack.c.b16 %v958, %v954
        %v1163 = vpack.c.b16 %v963, %v959
        %v1164 = vpack.c.b16 %v964, %v960
        %v1165 = vpack.c.b16 %v965, %v961
        %v1166 = vpack.c.b16 %v966, %v962
        %v1167 = vpack.c.b16 %v971, %v967
        %v1168 = vpack.c.b16 %v972, %v968
        %v1169 = vpack.c.b16 %v973, %v969
        %v1170 = vpack.c.b16 %v974, %v970
        %v1171 = vpack.c.b16 %v979, %v975
        %v1172 = vpack.c.b16 %v980, %v976
        %v1173 = vpack.c.b16 %v981, %v977
        %v1174 = vpack.c.b16 %v982, %v978
        %v1175 = vpack.c.b16 %v987, %v983
        %v1176 = vpack.c.b16 %v988, %v984
        %v1177 = vpack.c.b16 %v989, %v985
        %v1178 = vpack.c.b16 %v990, %v986
        %v1179 = vpack.c.b16 %v995, %v991
        %v1180 = vpack.c.b16 %v996, %v992
        %v1181 = vpack.c.b16 %v997, %v993
        %v1182 = vpack.c.b16 %v998, %v994
        %v1183 = vpack.c.b16 %v1003, %v999
        %v1184 = vpack.c.b16 %v1004, %v1000
        %v1185 = vpack.c.b16 %v1005, %v1001
        %v1186 = vpack.c.b16 %v1006, %v1002
        %v1187 = vpack.c.b16 %v1011, %v1007
        %v1188 = vpack.c.b16 %v1012, %v1008
        %v1189 = vpack.c.b16 %v1013, %v1009
        %v1190 = vpack.c.b16 %v1014, %v1010
        %v1191 = vpack.c.b16 %v1019, %v1015
        %v1192 = vpack.c.b16 %v1020, %v1016
        %v1193 = vpack.c.b16 %v1021, %v1017
        %v1194 = vpack.c.b16 %v1022, %v1018
        %v1195 = vpack.c.b16 %v1027, %v1023
        %v1196 = vpack.c.b16 %v1028, %v1024
        %v1197 = vpack.c.b16 %v1029, %v1025
        %v1198 = vpack.c.b16 %v1030, %v1026
        %v1199 = vpack.c.b16 %v1035, %v1031
        %v1200 = vpack.c.b16 %v1036, %v1032
        %v1201 = vpack.c.b16 %v1037, %v1033
        %v1202 = vpack.c.b16 %v1038, %v1034
        %v1203 = vpack.c.b16 %v1043, %v1039
        %v1204 = vpack.c.b16 %v1044, %v1040
        %v1205 = vpack.c.b16 %v1045, %v1041
        %v1206 = vpack.c.b16 %v1046, %v1042
        %v1207 = vpack.c.b16 %v1051, %v1047
        %v1208 = vpack.c.b16 %v1052, %v1048
        %v1209 = vpack.c.b16 %v1053, %v1049
        %v1210 = vpack.c.b16 %v1054, %v1050
        %v1211 = vpack.c.b16 %v1059, %v1055
        %v1212 = vpack.c.b16 %v1060, %v1056
        %v1213 = vpack.c.b16 %v1061, %v1057
        %v1214 = vpack.c.b16 %v1062, %v1058
        %v1215 = vpack.c.b16 %v1067, %v1063
        %v1216 = vpack.c.b16 %v1068, %v1064
        %v1217 = vpack.c.b16 %v1069, %v1065
        %v1218 = vpack.c.b16 %v1070, %v1066
        %v1219 = vpack.c.b16 %v1075, %v1071
        %v1220 = vpack.c.b16 %v1076, %v1072
        %v1221 = vpack.c.b16 %v1077, %v1073
        %v1222 = vpack.c.b16 %v1078, %v1074
        %v1223 = vpack.c.b16 %v1083, %v1079
        %v1224 = vpack.c.b16 %v1084, %v1080
        %v1225 = vpack.c.b16 %v1085, %v1081
        %v1226 = vpack.c.b16 %v1086, %v1082
        %v1227 = vpack.c.b16 %v1091, %v1087
        %v1228 = vpack.c.b16 %v1092, %v1088
        %v1229 = vpack.c.b16 %v1093, %v1089
        %v1230 = vpack.c.b16 %v1094, %v1090
        %v1231 = vpack.c.b16 %v1099, %v1095
        %v1232 = vpack.c.b16 %v1100, %v1096
        %v1233 = vpack.c.b16 %v1101, %v1097
        %v1234 = vpack.c.b16 %v1102, %v1098
        %v1235 = vpack.c.b16 %v1107, %v1103
        %v1236 = vpack.c.b16 %v1108, %v1104
        %v1237 = vpack.c.b16 %v1109, %v1105
        %v1238 = vpack.c.b16 %v1110, %v1106
        %1367 = vmatprep.subr.bf16.mxu0 %v1112
        %1368 = vmatpush1.bf16.msra.mxu0 %v1111
        %1369 = vmatprep.subr.bf16.mxu0 %v1116
        %1370 = vmatpush1.bf16.msra.mxu0 %v1115
        %1371 = vmatprep.subr.bf16.mxu0 %v1120
        %1372 = vmatpush1.bf16.msra.mxu0 %v1119
        %1373 = vmatprep.subr.bf16.mxu0 %v1124
        %1374 = vmatpush1.bf16.msra.mxu0 %v1123
        %1375 = vmatprep.subr.bf16.mxu0 %v1128
        %1376 = vmatpush1.bf16.msra.mxu0 %v1127
        %1377 = vmatprep.subr.bf16.mxu0 %v1132
        %1378 = vmatpush1.bf16.msra.mxu0 %v1131
        %1379 = vmatprep.subr.bf16.mxu0 %v1136
        %1380 = vmatpush1.bf16.msra.mxu0 %v1135
        %1381 = vmatprep.subr.bf16.mxu0 %v1140
        %1382 = vmatpush1.bf16.msra.mxu0 %v1139
        %1383 = vmatprep.subr.bf16.mxu0 %v1144
        %1384 = vmatpush1.bf16.msra.mxu0 %v1143
        %1385 = vmatprep.subr.bf16.mxu0 %v1148
        %1386 = vmatpush1.bf16.msra.mxu0 %v1147
        %1387 = vmatprep.subr.bf16.mxu0 %v1152
        %1388 = vmatpush1.bf16.msra.mxu0 %v1151
        %1389 = vmatprep.subr.bf16.mxu0 %v1156
        %1390 = vmatpush1.bf16.msra.mxu0 %v1155
        %1391 = vmatprep.subr.bf16.mxu0 %v1160
        %1392 = vmatpush1.bf16.msra.mxu0 %v1159
        %1393 = vmatprep.subr.bf16.mxu0 %v1164
        %1394 = vmatpush1.bf16.msra.mxu0 %v1163
        %1395 = vmatprep.subr.bf16.mxu0 %v1168
        %1396 = vmatpush1.bf16.msra.mxu0 %v1167
        %1397 = vmatprep.subr.bf16.mxu0 %v1172
        %1398 = vmatpush1.bf16.msra.mxu0 %v1171
        %1399 = vmatprep.mubr.bf16.mxu0 %v664
        %1400 = vmatmul.mubr.bf16.gmra.mrb[0].mxu0 %v663
        %v1401 = vpop.f32.mrb[0].mxu0
        %v1402 = vadd.f32 0.0, %v1401
        %v1403 = vpop.f32.mrb[0].mxu0
        %v1404 = vadd.f32 0.0, %v1403
        %v1405 = vpop.f32.mrb[0].mxu0
        %v1406 = vadd.f32 0.0, %v1405
        %v1407 = vpop.f32.mrb[0].mxu0
        %v1408 = vadd.f32 0.0, %v1407
        %1409 = vmatprep.mubr.bf16.mxu0 %v668
        %1410 = vmatmul.mubr.bf16.gmra.mrb[0].mxu0 %v667
        %v1411 = vpop.f32.mrb[0].mxu0
        %v1412 = vadd.f32 0.0, %v1411
        %v1413 = vpop.f32.mrb[0].mxu0
        %v1414 = vadd.f32 0.0, %v1413
        %v1415 = vpop.f32.mrb[0].mxu0
        %v1416 = vadd.f32 0.0, %v1415
        %v1417 = vpop.f32.mrb[0].mxu0
        %v1418 = vadd.f32 0.0, %v1417
        %1419 = vmatprep.mubr.bf16.mxu0 %v672
        %1420 = vmatmul.mubr.bf16.gmra.mrb[0].mxu0 %v671
        %v1421 = vpop.f32.mrb[0].mxu0
        %v1422 = vadd.f32 0.0, %v1421
        %v1423 = vpop.f32.mrb[0].mxu0
        %v1424 = vadd.f32 0.0, %v1423
        %v1425 = vpop.f32.mrb[0].mxu0
        %v1426 = vadd.f32 0.0, %v1425
        %v1427 = vpop.f32.mrb[0].mxu0
        %v1428 = vadd.f32 0.0, %v1427
        %1429 = vmatprep.mubr.bf16.mxu0 %v676
        %1430 = vmatmul.mubr.bf16.gmra.mrb[0].mxu0 %v675
        %v1431 = vpop.f32.mrb[0].mxu0
        %v1432 = vadd.f32 0.0, %v1431
        %v1433 = vpop.f32.mrb[0].mxu0
        %v1434 = vadd.f32 0.0, %v1433
        %v1435 = vpop.f32.mrb[0].mxu0
        %v1436 = vadd.f32 0.0, %v1435
        %v1437 = vpop.f32.mrb[0].mxu0
        %v1438 = vadd.f32 0.0, %v1437
        %1439 = vmatprep.mubr.bf16.mxu0 %v680
        %1440 = vmatmul.mubr.bf16.gmra.mrb[0].mxu0 %v679
        %v1441 = vpop.f32.mrb[0].mxu0
        %v1442 = vadd.f32 0.0, %v1441
        %v1443 = vpop.f32.mrb[0].mxu0
        %v1444 = vadd.f32 0.0, %v1443
        %v1445 = vpop.f32.mrb[0].mxu0
        %v1446 = vadd.f32 0.0, %v1445
        %v1447 = vpop.f32.mrb[0].mxu0
        %v1448 = vadd.f32 0.0, %v1447
        %1449 = vmatprep.mubr.bf16.mxu0 %v684
        %1450 = vmatmul.mubr.bf16.gmra.mrb[0].mxu0 %v683
        %v1451 = vpop.f32.mrb[0].mxu0
        %v1452 = vadd.f32 0.0, %v1451
        %v1453 = vpop.f32.mrb[0].mxu0
        %v1454 = vadd.f32 0.0, %v1453
        %v1455 = vpop.f32.mrb[0].mxu0
        %v1456 = vadd.f32 0.0, %v1455
        %v1457 = vpop.f32.mrb[0].mxu0
        %v1458 = vadd.f32 0.0, %v1457
        %1459 = vmatprep.mubr.bf16.mxu0 %v688
        %1460 = vmatmul.mubr.bf16.gmra.mrb[0].mxu0 %v687
        %v1461 = vpop.f32.mrb[0].mxu0
        %v1462 = vadd.f32 0.0, %v1461
        %v1463 = vpop.f32.mrb[0].mxu0
        %v1464 = vadd.f32 0.0, %v1463
        %v1465 = vpop.f32.mrb[0].mxu0
        %v1466 = vadd.f32 0.0, %v1465
        %v1467 = vpop.f32.mrb[0].mxu0
        %v1468 = vadd.f32 0.0, %v1467
        %1469 = vmatprep.mubr.bf16.mxu0 %v692
        %1470 = vmatmul.mubr.bf16.gmra.mrb[0].mxu0 %v691
        %v1471 = vpop.f32.mrb[0].mxu0
        %v1472 = vadd.f32 0.0, %v1471
        %v1473 = vpop.f32.mrb[0].mxu0
        %v1474 = vadd.f32 0.0, %v1473
        %v1475 = vpop.f32.mrb[0].mxu0
        %v1476 = vadd.f32 0.0, %v1475
        %v1477 = vpop.f32.mrb[0].mxu0
        %v1478 = vadd.f32 0.0, %v1477
        %1479 = vdwg.mxu0
        %1480 = vmatprep.subr.bf16.mxu0 %v1176
        %1481 = vmatpush1.bf16.msra.mxu0 %v1175
        %1482 = vmatprep.subr.bf16.mxu0 %v1180
        %1483 = vmatpush1.bf16.msra.mxu0 %v1179
        %1484 = vmatprep.subr.bf16.mxu0 %v1184
        %1485 = vmatpush1.bf16.msra.mxu0 %v1183
        %1486 = vmatprep.subr.bf16.mxu0 %v1188
        %1487 = vmatpush1.bf16.msra.mxu0 %v1187
        %1488 = vmatprep.subr.bf16.mxu0 %v1192
        %1489 = vmatpush1.bf16.msra.mxu0 %v1191
        %1490 = vmatprep.subr.bf16.mxu0 %v1196
        %1491 = vmatpush1.bf16.msra.mxu0 %v1195
        %1492 = vmatprep.subr.bf16.mxu0 %v1200
        %1493 = vmatpush1.bf16.msra.mxu0 %v1199
        %1494 = vmatprep.subr.bf16.mxu0 %v1204
        %1495 = vmatpush1.bf16.msra.mxu0 %v1203
        %1496 = vmatprep.subr.bf16.mxu0 %v1208
        %1497 = vmatpush1.bf16.msra.mxu0 %v1207
        %1498 = vmatprep.subr.bf16.mxu0 %v1212
        %1499 = vmatpush1.bf16.msra.mxu0 %v1211
        %1500 = vmatprep.subr.bf16.mxu0 %v1216
        %1501 = vmatpush1.bf16.msra.mxu0 %v1215
        %1502 = vmatprep.subr.bf16.mxu0 %v1220
        %1503 = vmatpush1.bf16.msra.mxu0 %v1219
        %1504 = vmatprep.subr.bf16.mxu0 %v1224
        %1505 = vmatpush1.bf16.msra.mxu0 %v1223
        %1506 = vmatprep.subr.bf16.mxu0 %v1228
        %1507 = vmatpush1.bf16.msra.mxu0 %v1227
        %1508 = vmatprep.subr.bf16.mxu0 %v1232
        %1509 = vmatpush1.bf16.msra.mxu0 %v1231
        %1510 = vmatprep.subr.bf16.mxu0 %v1236
        %1511 = vmatpush1.bf16.msra.mxu0 %v1235
        %1512 = vmatprep.mubr.bf16.mxu0 %v666
        %1513 = vmatmul.mubr.bf16.gmra.mrb[0].mxu0 %v665
        %v1514 = vpop.f32.mrb[0].mxu0
        %v1515 = vadd.f32 %v1402, %v1514
        %v1516 = vpop.f32.mrb[0].mxu0
        %v1517 = vadd.f32 %v1404, %v1516
        %v1518 = vpop.f32.mrb[0].mxu0
        %v1519 = vadd.f32 %v1406, %v1518
        %v1520 = vpop.f32.mrb[0].mxu0
        %v1521 = vadd.f32 %v1408, %v1520
        %1522 = vmatprep.mubr.bf16.mxu0 %v670
        %1523 = vmatmul.mubr.bf16.gmra.mrb[0].mxu0 %v669
        %v1524 = vpop.f32.mrb[0].mxu0
        %v1525 = vadd.f32 %v1412, %v1524
        %v1526 = vpop.f32.mrb[0].mxu0
        %v1527 = vadd.f32 %v1414, %v1526
        %v1528 = vpop.f32.mrb[0].mxu0
        %v1529 = vadd.f32 %v1416, %v1528
        %v1530 = vpop.f32.mrb[0].mxu0
        %v1531 = vadd.f32 %v1418, %v1530
        %1532 = vmatprep.mubr.bf16.mxu0 %v674
        %1533 = vmatmul.mubr.bf16.gmra.mrb[0].mxu0 %v673
        %v1534 = vpop.f32.mrb[0].mxu0
        %v1535 = vadd.f32 %v1422, %v1534
        %v1536 = vpop.f32.mrb[0].mxu0
        %v1537 = vadd.f32 %v1424, %v1536
        %v1538 = vpop.f32.mrb[0].mxu0
        %v1539 = vadd.f32 %v1426, %v1538
        %v1540 = vpop.f32.mrb[0].mxu0
        %v1541 = vadd.f32 %v1428, %v1540
        %1542 = vmatprep.mubr.bf16.mxu0 %v678
        %1543 = vmatmul.mubr.bf16.gmra.mrb[0].mxu0 %v677
        %v1544 = vpop.f32.mrb[0].mxu0
        %v1545 = vadd.f32 %v1432, %v1544
        %v1546 = vpop.f32.mrb[0].mxu0
        %v1547 = vadd.f32 %v1434, %v1546
        %v1548 = vpop.f32.mrb[0].mxu0
        %v1549 = vadd.f32 %v1436, %v1548
        %v1550 = vpop.f32.mrb[0].mxu0
        %v1551 = vadd.f32 %v1438, %v1550
        %1552 = vmatprep.mubr.bf16.mxu0 %v682
        %1553 = vmatmul.mubr.bf16.gmra.mrb[0].mxu0 %v681
        %v1554 = vpop.f32.mrb[0].mxu0
        %v1555 = vadd.f32 %v1442, %v1554
        %v1556 = vpop.f32.mrb[0].mxu0
        %v1557 = vadd.f32 %v1444, %v1556
        %v1558 = vpop.f32.mrb[0].mxu0
        %v1559 = vadd.f32 %v1446, %v1558
        %v1560 = vpop.f32.mrb[0].mxu0
        %v1561 = vadd.f32 %v1448, %v1560
        %1562 = vmatprep.mubr.bf16.mxu0 %v686
        %1563 = vmatmul.mubr.bf16.gmra.mrb[0].mxu0 %v685
        %v1564 = vpop.f32.mrb[0].mxu0
        %v1565 = vadd.f32 %v1452, %v1564
        %v1566 = vpop.f32.mrb[0].mxu0
        %v1567 = vadd.f32 %v1454, %v1566
        %v1568 = vpop.f32.mrb[0].mxu0
        %v1569 = vadd.f32 %v1456, %v1568
        %v1570 = vpop.f32.mrb[0].mxu0
        %v1571 = vadd.f32 %v1458, %v1570
        %1572 = vmatprep.mubr.bf16.mxu0 %v690
        %1573 = vmatmul.mubr.bf16.gmra.mrb[0].mxu0 %v689
        %v1574 = vpop.f32.mrb[0].mxu0
        %v1575 = vadd.f32 %v1462, %v1574
        %v1576 = vpop.f32.mrb[0].mxu0
        %v1577 = vadd.f32 %v1464, %v1576
        %v1578 = vpop.f32.mrb[0].mxu0
        %v1579 = vadd.f32 %v1466, %v1578
        %v1580 = vpop.f32.mrb[0].mxu0
        %v1581 = vadd.f32 %v1468, %v1580
        %1582 = vmatprep.mubr.bf16.mxu0 %v694
        %1583 = vmatmul.mubr.bf16.gmra.mrb[0].mxu0 %v693
        %v1584 = vpop.f32.mrb[0].mxu0
        %v1585 = vadd.f32 %v1472, %v1584
        %v1586 = vpop.f32.mrb[0].mxu0
        %v1587 = vadd.f32 %v1474, %v1586
        %v1588 = vpop.f32.mrb[0].mxu0
        %v1589 = vadd.f32 %v1476, %v1588
        %v1590 = vpop.f32.mrb[0].mxu0
        %v1591 = vadd.f32 %v1478, %v1590
        %1592 = vdwg.mxu0
        %1593 = vmatprep.subr.bf16.mxu0 %v1114
        %1594 = vmatpush1.bf16.msra.mxu0 %v1113
        %1595 = vmatprep.subr.bf16.mxu0 %v1118
        %1596 = vmatpush1.bf16.msra.mxu0 %v1117
        %1597 = vmatprep.subr.bf16.mxu0 %v1122
        %1598 = vmatpush1.bf16.msra.mxu0 %v1121
        %1599 = vmatprep.subr.bf16.mxu0 %v1126
        %1600 = vmatpush1.bf16.msra.mxu0 %v1125
        %1601 = vmatprep.subr.bf16.mxu0 %v1130
        %1602 = vmatpush1.bf16.msra.mxu0 %v1129
        %1603 = vmatprep.subr.bf16.mxu0 %v1134
        %1604 = vmatpush1.bf16.msra.mxu0 %v1133
        %1605 = vmatprep.subr.bf16.mxu0 %v1138
        %1606 = vmatpush1.bf16.msra.mxu0 %v1137
        %1607 = vmatprep.subr.bf16.mxu0 %v1142
        %1608 = vmatpush1.bf16.msra.mxu0 %v1141
        %1609 = vmatprep.subr.bf16.mxu0 %v1146
        %1610 = vmatpush1.bf16.msra.mxu0 %v1145
        %1611 = vmatprep.subr.bf16.mxu0 %v1150
        %1612 = vmatpush1.bf16.msra.mxu0 %v1149
        %1613 = vmatprep.subr.bf16.mxu0 %v1154
        %1614 = vmatpush1.bf16.msra.mxu0 %v1153
        %1615 = vmatprep.subr.bf16.mxu0 %v1158
        %1616 = vmatpush1.bf16.msra.mxu0 %v1157
        %1617 = vmatprep.subr.bf16.mxu0 %v1162
        %1618 = vmatpush1.bf16.msra.mxu0 %v1161
        %1619 = vmatprep.subr.bf16.mxu0 %v1166
        %1620 = vmatpush1.bf16.msra.mxu0 %v1165
        %1621 = vmatprep.subr.bf16.mxu0 %v1170
        %1622 = vmatpush1.bf16.msra.mxu0 %v1169
        %1623 = vmatprep.subr.bf16.mxu0 %v1174
        %1624 = vmatpush1.bf16.msra.mxu0 %v1173
        %1625 = vmatprep.mubr.bf16.mxu0 %v664
        %1626 = vmatmul.mubr.bf16.gmra.mrb[0].mxu0 %v663
        %v1627 = vpop.f32.mrb[0].mxu0
        %v1628 = vadd.f32 0.0, %v1627
        %v1629 = vpop.f32.mrb[0].mxu0
        %v1630 = vadd.f32 0.0, %v1629
        %v1631 = vpop.f32.mrb[0].mxu0
        %v1632 = vadd.f32 0.0, %v1631
        %v1633 = vpop.f32.mrb[0].mxu0
        %v1634 = vadd.f32 0.0, %v1633
        %1635 = vmatprep.mubr.bf16.mxu0 %v668
        %1636 = vmatmul.mubr.bf16.gmra.mrb[0].mxu0 %v667
        %v1637 = vpop.f32.mrb[0].mxu0
        %v1638 = vadd.f32 0.0, %v1637
        %v1639 = vpop.f32.mrb[0].mxu0
        %v1640 = vadd.f32 0.0, %v1639
        %v1641 = vpop.f32.mrb[0].mxu0
        %v1642 = vadd.f32 0.0, %v1641
        %v1643 = vpop.f32.mrb[0].mxu0
        %v1644 = vadd.f32 0.0, %v1643
        %1645 = vmatprep.mubr.bf16.mxu0 %v672
        %1646 = vmatmul.mubr.bf16.gmra.mrb[0].mxu0 %v671
        %v1647 = vpop.f32.mrb[0].mxu0
        %v1648 = vadd.f32 0.0, %v1647
        %v1649 = vpop.f32.mrb[0].mxu0
        %v1650 = vadd.f32 0.0, %v1649
        %v1651 = vpop.f32.mrb[0].mxu0
        %v1652 = vadd.f32 0.0, %v1651
        %v1653 = vpop.f32.mrb[0].mxu0
        %v1654 = vadd.f32 0.0, %v1653
        %1655 = vmatprep.mubr.bf16.mxu0 %v676
        %1656 = vmatmul.mubr.bf16.gmra.mrb[0].mxu0 %v675
        %v1657 = vpop.f32.mrb[0].mxu0
        %v1658 = vadd.f32 0.0, %v1657
        %v1659 = vpop.f32.mrb[0].mxu0
        %v1660 = vadd.f32 0.0, %v1659
        %v1661 = vpop.f32.mrb[0].mxu0
        %v1662 = vadd.f32 0.0, %v1661
        %v1663 = vpop.f32.mrb[0].mxu0
        %v1664 = vadd.f32 0.0, %v1663
        %1665 = vmatprep.mubr.bf16.mxu0 %v680
        %1666 = vmatmul.mubr.bf16.gmra.mrb[0].mxu0 %v679
        %v1667 = vpop.f32.mrb[0].mxu0
        %v1668 = vadd.f32 0.0, %v1667
        %v1669 = vpop.f32.mrb[0].mxu0
        %v1670 = vadd.f32 0.0, %v1669
        %v1671 = vpop.f32.mrb[0].mxu0
        %v1672 = vadd.f32 0.0, %v1671
        %v1673 = vpop.f32.mrb[0].mxu0
        %v1674 = vadd.f32 0.0, %v1673
        %1675 = vmatprep.mubr.bf16.mxu0 %v684
        %1676 = vmatmul.mubr.bf16.gmra.mrb[0].mxu0 %v683
        %v1677 = vpop.f32.mrb[0].mxu0
        %v1678 = vadd.f32 0.0, %v1677
        %v1679 = vpop.f32.mrb[0].mxu0
        %v1680 = vadd.f32 0.0, %v1679
        %v1681 = vpop.f32.mrb[0].mxu0
        %v1682 = vadd.f32 0.0, %v1681
        %v1683 = vpop.f32.mrb[0].mxu0
        %v1684 = vadd.f32 0.0, %v1683
        %1685 = vmatprep.mubr.bf16.mxu0 %v688
        %1686 = vmatmul.mubr.bf16.gmra.mrb[0].mxu0 %v687
        %v1687 = vpop.f32.mrb[0].mxu0
        %v1688 = vadd.f32 0.0, %v1687
        %v1689 = vpop.f32.mrb[0].mxu0
        %v1690 = vadd.f32 0.0, %v1689
        %v1691 = vpop.f32.mrb[0].mxu0
        %v1692 = vadd.f32 0.0, %v1691
        %v1693 = vpop.f32.mrb[0].mxu0
        %v1694 = vadd.f32 0.0, %v1693
        %1695 = vmatprep.mubr.bf16.mxu0 %v692
        %1696 = vmatmul.mubr.bf16.gmra.mrb[0].mxu0 %v691
        %v1697 = vpop.f32.mrb[0].mxu0
        %v1698 = vadd.f32 0.0, %v1697
        %v1699 = vpop.f32.mrb[0].mxu0
        %v1700 = vadd.f32 0.0, %v1699
        %v1701 = vpop.f32.mrb[0].mxu0
        %v1702 = vadd.f32 0.0, %v1701
        %v1703 = vpop.f32.mrb[0].mxu0
        %v1704 = vadd.f32 0.0, %v1703
        %1705 = vdwg.mxu0
        %1706 = vmatprep.subr.bf16.mxu0 %v1178
        %1707 = vmatpush1.bf16.msra.mxu0 %v1177
        %1708 = vmatprep.subr.bf16.mxu0 %v1182
        %1709 = vmatpush1.bf16.msra.mxu0 %v1181
        %1710 = vmatprep.subr.bf16.mxu0 %v1186
        %1711 = vmatpush1.bf16.msra.mxu0 %v1185
        %1712 = vmatprep.subr.bf16.mxu0 %v1190
        %1713 = vmatpush1.bf16.msra.mxu0 %v1189
        %1714 = vmatprep.subr.bf16.mxu0 %v1194
        %1715 = vmatpush1.bf16.msra.mxu0 %v1193
        %1716 = vmatprep.subr.bf16.mxu0 %v1198
        %1717 = vmatpush1.bf16.msra.mxu0 %v1197
        %1718 = vmatprep.subr.bf16.mxu0 %v1202
        %1719 = vmatpush1.bf16.msra.mxu0 %v1201
        %1720 = vmatprep.subr.bf16.mxu0 %v1206
        %1721 = vmatpush1.bf16.msra.mxu0 %v1205
        %1722 = vmatprep.subr.bf16.mxu0 %v1210
        %1723 = vmatpush1.bf16.msra.mxu0 %v1209
        %1724 = vmatprep.subr.bf16.mxu0 %v1214
        %1725 = vmatpush1.bf16.msra.mxu0 %v1213
        %1726 = vmatprep.subr.bf16.mxu0 %v1218
        %1727 = vmatpush1.bf16.msra.mxu0 %v1217
        %1728 = vmatprep.subr.bf16.mxu0 %v1222
        %1729 = vmatpush1.bf16.msra.mxu0 %v1221
        %1730 = vmatprep.subr.bf16.mxu0 %v1226
        %1731 = vmatpush1.bf16.msra.mxu0 %v1225
        %1732 = vmatprep.subr.bf16.mxu0 %v1230
        %1733 = vmatpush1.bf16.msra.mxu0 %v1229
        %1734 = vmatprep.subr.bf16.mxu0 %v1234
        %1735 = vmatpush1.bf16.msra.mxu0 %v1233
        %1736 = vmatprep.subr.bf16.mxu0 %v1238
        %1737 = vmatpush1.bf16.msra.mxu0 %v1237
        %1738 = vmatprep.mubr.bf16.mxu0 %v666
        %1739 = vmatmul.mubr.bf16.gmra.mrb[0].mxu0 %v665
        %v1740 = vpop.f32.mrb[0].mxu0
        %v1741 = vadd.f32 %v1628, %v1740
        %v1742 = vpop.f32.mrb[0].mxu0
        %v1743 = vadd.f32 %v1630, %v1742
        %v1744 = vpop.f32.mrb[0].mxu0
        %v1745 = vadd.f32 %v1632, %v1744
        %v1746 = vpop.f32.mrb[0].mxu0
        %v1747 = vadd.f32 %v1634, %v1746
        %1748 = vmatprep.mubr.bf16.mxu0 %v670
        %1749 = vmatmul.mubr.bf16.gmra.mrb[0].mxu0 %v669
        %v1750 = vpop.f32.mrb[0].mxu0
        %v1751 = vadd.f32 %v1638, %v1750
        %v1752 = vpop.f32.mrb[0].mxu0
        %v1753 = vadd.f32 %v1640, %v1752
        %v1754 = vpop.f32.mrb[0].mxu0
        %v1755 = vadd.f32 %v1642, %v1754
        %v1756 = vpop.f32.mrb[0].mxu0
        %v1757 = vadd.f32 %v1644, %v1756
        %1758 = vmatprep.mubr.bf16.mxu0 %v674
        %1759 = vmatmul.mubr.bf16.gmra.mrb[0].mxu0 %v673
        %v1760 = vpop.f32.mrb[0].mxu0
        %v1761 = vadd.f32 %v1648, %v1760
        %v1762 = vpop.f32.mrb[0].mxu0
        %v1763 = vadd.f32 %v1650, %v1762
        %v1764 = vpop.f32.mrb[0].mxu0
        %v1765 = vadd.f32 %v1652, %v1764
        %v1766 = vpop.f32.mrb[0].mxu0
        %v1767 = vadd.f32 %v1654, %v1766
        %1768 = vmatprep.mubr.bf16.mxu0 %v678
        %1769 = vmatmul.mubr.bf16.gmra.mrb[0].mxu0 %v677
        %v1770 = vpop.f32.mrb[0].mxu0
        %v1771 = vadd.f32 %v1658, %v1770
        %v1772 = vpop.f32.mrb[0].mxu0
        %v1773 = vadd.f32 %v1660, %v1772
        %v1774 = vpop.f32.mrb[0].mxu0
        %v1775 = vadd.f32 %v1662, %v1774
        %v1776 = vpop.f32.mrb[0].mxu0
        %v1777 = vadd.f32 %v1664, %v1776
        %1778 = vmatprep.mubr.bf16.mxu0 %v682
        %1779 = vmatmul.mubr.bf16.gmra.mrb[0].mxu0 %v681
        %v1780 = vpop.f32.mrb[0].mxu0
        %v1781 = vadd.f32 %v1668, %v1780
        %v1782 = vpop.f32.mrb[0].mxu0
        %v1783 = vadd.f32 %v1670, %v1782
        %v1784 = vpop.f32.mrb[0].mxu0
        %v1785 = vadd.f32 %v1672, %v1784
        %v1786 = vpop.f32.mrb[0].mxu0
        %v1787 = vadd.f32 %v1674, %v1786
        %1788 = vmatprep.mubr.bf16.mxu0 %v686
        %1789 = vmatmul.mubr.bf16.gmra.mrb[0].mxu0 %v685
        %v1790 = vpop.f32.mrb[0].mxu0
        %v1791 = vadd.f32 %v1678, %v1790
        %v1792 = vpop.f32.mrb[0].mxu0
        %v1793 = vadd.f32 %v1680, %v1792
        %v1794 = vpop.f32.mrb[0].mxu0
        %v1795 = vadd.f32 %v1682, %v1794
        %v1796 = vpop.f32.mrb[0].mxu0
        %v1797 = vadd.f32 %v1684, %v1796
        %1798 = vmatprep.mubr.bf16.mxu0 %v690
        %1799 = vmatmul.mubr.bf16.gmra.mrb[0].mxu0 %v689
        %v1800 = vpop.f32.mrb[0].mxu0
        %v1801 = vadd.f32 %v1688, %v1800
        %v1802 = vpop.f32.mrb[0].mxu0
        %v1803 = vadd.f32 %v1690, %v1802
        %v1804 = vpop.f32.mrb[0].mxu0
        %v1805 = vadd.f32 %v1692, %v1804
        %v1806 = vpop.f32.mrb[0].mxu0
        %v1807 = vadd.f32 %v1694, %v1806
        %1808 = vmatprep.mubr.bf16.mxu0 %v694
        %1809 = vmatmul.mubr.bf16.gmra.mrb[0].mxu0 %v693
        %v1810 = vpop.f32.mrb[0].mxu0
        %v1811 = vadd.f32 %v1698, %v1810
        %v1812 = vpop.f32.mrb[0].mxu0
        %v1813 = vadd.f32 %v1700, %v1812
        %v1814 = vpop.f32.mrb[0].mxu0
        %v1815 = vadd.f32 %v1702, %v1814
        %v1816 = vpop.f32.mrb[0].mxu0
        %v1817 = vadd.f32 %v1704, %v1816
        %1818 = vdwg.mxu0
        %v1819 = vadd.f32 %v343, %v1515
        %v1820 = vadd.f32 %v344, %v1517
        %v1821 = vadd.f32 %v345, %v1741
        %v1822 = vadd.f32 %v346, %v1743
        %v1823 = vadd.f32 %v347, %v1519
        %v1824 = vadd.f32 %v348, %v1521
        %v1825 = vadd.f32 %v349, %v1745
        %v1826 = vadd.f32 %v350, %v1747
        %v1827 = vadd.f32 %v351, %v1525
        %v1828 = vadd.f32 %v352, %v1527
        %v1829 = vadd.f32 %v353, %v1751
        %v1830 = vadd.f32 %v354, %v1753
        %v1831 = vadd.f32 %v355, %v1529
        %v1832 = vadd.f32 %v356, %v1531
        %v1833 = vadd.f32 %v357, %v1755
        %v1834 = vadd.f32 %v358, %v1757
        %v1835 = vadd.f32 %v359, %v1535
        %v1836 = vadd.f32 %v360, %v1537
        %v1837 = vadd.f32 %v361, %v1761
        %v1838 = vadd.f32 %v362, %v1763
        %v1839 = vadd.f32 %v363, %v1539
        %v1840 = vadd.f32 %v364, %v1541
        %v1841 = vadd.f32 %v365, %v1765
        %v1842 = vadd.f32 %v366, %v1767
        %v1843 = vadd.f32 %v367, %v1545
        %v1844 = vadd.f32 %v368, %v1547
        %v1845 = vadd.f32 %v369, %v1771
        %v1846 = vadd.f32 %v370, %v1773
        %v1847 = vadd.f32 %v371, %v1549
        %v1848 = vadd.f32 %v372, %v1551
        %v1849 = vadd.f32 %v373, %v1775
        %v1850 = vadd.f32 %v374, %v1777
        %v1851 = vadd.f32 %v375, %v1555
        %v1852 = vadd.f32 %v376, %v1557
        %v1853 = vadd.f32 %v377, %v1781
        %v1854 = vadd.f32 %v378, %v1783
        %v1855 = vadd.f32 %v379, %v1559
        %v1856 = vadd.f32 %v380, %v1561
        %v1857 = vadd.f32 %v381, %v1785
        %v1858 = vadd.f32 %v382, %v1787
        %v1859 = vadd.f32 %v383, %v1565
        %v1860 = vadd.f32 %v384, %v1567
        %v1861 = vadd.f32 %v385, %v1791
        %v1862 = vadd.f32 %v386, %v1793
        %v1863 = vadd.f32 %v387, %v1569
        %v1864 = vadd.f32 %v388, %v1571
        %v1865 = vadd.f32 %v389, %v1795
        %v1866 = vadd.f32 %v390, %v1797
        %v1867 = vadd.f32 %v391, %v1575
        %v1868 = vadd.f32 %v392, %v1577
        %v1869 = vadd.f32 %v393, %v1801
        %v1870 = vadd.f32 %v394, %v1803
        %v1871 = vadd.f32 %v395, %v1579
        %v1872 = vadd.f32 %v396, %v1581
        %v1873 = vadd.f32 %v397, %v1805
        %v1874 = vadd.f32 %v398, %v1807
        %v1875 = vadd.f32 %v399, %v1585
        %v1876 = vadd.f32 %v400, %v1587
        %v1877 = vadd.f32 %v401, %v1811
        %v1878 = vadd.f32 %v402, %v1813
        %v1879 = vadd.f32 %v403, %v1589
        %v1880 = vadd.f32 %v404, %v1591
        %v1881 = vadd.f32 %v405, %v1815
        %v1882 = vadd.f32 %v406, %v1817
        %1883 = vst [vmem:[#allocation2] sm:$0xff] %v1819
        %1884 = vst [vmem:[#allocation2 + $0x8] sm:$0xff] %v1820
        %1885 = vst [vmem:[#allocation2 + $0x10] sm:$0xff] %v1821
        %1886 = vst [vmem:[#allocation2 + $0x18] sm:$0xff] %v1822
        %1887 = vst [vmem:[#allocation2 + $0x20] sm:$0xff] %v1823
        %1888 = vst [vmem:[#allocation2 + $0x28] sm:$0xff] %v1824
        %1889 = vst [vmem:[#allocation2 + $0x30] sm:$0xff] %v1825
        %1890 = vst [vmem:[#allocation2 + $0x38] sm:$0xff] %v1826
        %1891 = vst [vmem:[#allocation2 + $0x40] sm:$0xff] %v1827
        %1892 = vst [vmem:[#allocation2 + $0x48] sm:$0xff] %v1828
        %1893 = vst [vmem:[#allocation2 + $0x50] sm:$0xff] %v1829
        %1894 = vst [vmem:[#allocation2 + $0x58] sm:$0xff] %v1830
        %1895 = vst [vmem:[#allocation2 + $0x60] sm:$0xff] %v1831
        %1896 = vst [vmem:[#allocation2 + $0x68] sm:$0xff] %v1832
        %1897 = vst [vmem:[#allocation2 + $0x70] sm:$0xff] %v1833
        %1898 = vst [vmem:[#allocation2 + $0x78] sm:$0xff] %v1834
        %1899 = vst [vmem:[#allocation2 + $0x80] sm:$0xff] %v1835
        %1900 = vst [vmem:[#allocation2 + $0x88] sm:$0xff] %v1836
        %1901 = vst [vmem:[#allocation2 + $0x90] sm:$0xff] %v1837
        %1902 = vst [vmem:[#allocation2 + $0x98] sm:$0xff] %v1838
        %1903 = vst [vmem:[#allocation2 + $0xa0] sm:$0xff] %v1839
        %1904 = vst [vmem:[#allocation2 + $0xa8] sm:$0xff] %v1840
        %1905 = vst [vmem:[#allocation2 + $0xb0] sm:$0xff] %v1841
        %1906 = vst [vmem:[#allocation2 + $0xb8] sm:$0xff] %v1842
        %1907 = vst [vmem:[#allocation2 + $0xc0] sm:$0xff] %v1843
        %1908 = vst [vmem:[#allocation2 + $0xc8] sm:$0xff] %v1844
        %1909 = vst [vmem:[#allocation2 + $0xd0] sm:$0xff] %v1845
        %1910 = vst [vmem:[#allocation2 + $0xd8] sm:$0xff] %v1846
        %1911 = vst [vmem:[#allocation2 + $0xe0] sm:$0xff] %v1847
        %1912 = vst [vmem:[#allocation2 + $0xe8] sm:$0xff] %v1848
        %1913 = vst [vmem:[#allocation2 + $0xf0] sm:$0xff] %v1849
        %1914 = vst [vmem:[#allocation2 + $0xf8] sm:$0xff] %v1850
        %1915 = vst [vmem:[#allocation2 + $0x100] sm:$0xff] %v1851
        %1916 = vst [vmem:[#allocation2 + $0x108] sm:$0xff] %v1852
        %1917 = vst [vmem:[#allocation2 + $0x110] sm:$0xff] %v1853
        %1918 = vst [vmem:[#allocation2 + $0x118] sm:$0xff] %v1854
        %1919 = vst [vmem:[#allocation2 + $0x120] sm:$0xff] %v1855
        %1920 = vst [vmem:[#allocation2 + $0x128] sm:$0xff] %v1856
        %1921 = vst [vmem:[#allocation2 + $0x130] sm:$0xff] %v1857
        %1922 = vst [vmem:[#allocation2 + $0x138] sm:$0xff] %v1858
        %1923 = vst [vmem:[#allocation2 + $0x140] sm:$0xff] %v1859
        %1924 = vst [vmem:[#allocation2 + $0x148] sm:$0xff] %v1860
        %1925 = vst [vmem:[#allocation2 + $0x150] sm:$0xff] %v1861
        %1926 = vst [vmem:[#allocation2 + $0x158] sm:$0xff] %v1862
        %1927 = vst [vmem:[#allocation2 + $0x160] sm:$0xff] %v1863
        %1928 = vst [vmem:[#allocation2 + $0x168] sm:$0xff] %v1864
        %1929 = vst [vmem:[#allocation2 + $0x170] sm:$0xff] %v1865
        %1930 = vst [vmem:[#allocation2 + $0x178] sm:$0xff] %v1866
        %1931 = vst [vmem:[#allocation2 + $0x180] sm:$0xff] %v1867
        %1932 = vst [vmem:[#allocation2 + $0x188] sm:$0xff] %v1868
        %1933 = vst [vmem:[#allocation2 + $0x190] sm:$0xff] %v1869
        %1934 = vst [vmem:[#allocation2 + $0x198] sm:$0xff] %v1870
        %1935 = vst [vmem:[#allocation2 + $0x1a0] sm:$0xff] %v1871
        %1936 = vst [vmem:[#allocation2 + $0x1a8] sm:$0xff] %v1872
        %1937 = vst [vmem:[#allocation2 + $0x1b0] sm:$0xff] %v1873
        %1938 = vst [vmem:[#allocation2 + $0x1b8] sm:$0xff] %v1874
        %1939 = vst [vmem:[#allocation2 + $0x1c0] sm:$0xff] %v1875
        %1940 = vst [vmem:[#allocation2 + $0x1c8] sm:$0xff] %v1876
        %1941 = vst [vmem:[#allocation2 + $0x1d0] sm:$0xff] %v1877
        %1942 = vst [vmem:[#allocation2 + $0x1d8] sm:$0xff] %v1878
        %1943 = vst [vmem:[#allocation2 + $0x1e0] sm:$0xff] %v1879
        %1944 = vst [vmem:[#allocation2 + $0x1e8] sm:$0xff] %v1880
        %1945 = vst [vmem:[#allocation2 + $0x1f0] sm:$0xff] %v1881
        %1946 = vst [vmem:[#allocation2 + $0x1f8] sm:$0xff] %v1882
        // Predicated region
        $region41: #{_w8a8_qkvfc1_forward.3} parent=31 // pred_check
          %p1947 = pneg %p275
        $region42: #{_w8a8_qkvfc1_forward.3} parent=31 // pred_check_branch
          %1949 = sbr.rel (%p1947) target = $region44
        $region43: #{_w8a8_qkvfc1_forward.3} parent=31 // pred_region
          %v1950 = vld [vmem:[#allocation2] sm:$0xff]
          %v1951 = vld [vmem:[#allocation2 + $0x8] sm:$0xff]
          %v1952 = vld [vmem:[#allocation2 + $0x10] sm:$0xff]
          %v1953 = vld [vmem:[#allocation2 + $0x18] sm:$0xff]
          %v1954 = vld [vmem:[#allocation2 + $0x20] sm:$0xff]
          %v1955 = vld [vmem:[#allocation2 + $0x28] sm:$0xff]
          %v1956 = vld [vmem:[#allocation2 + $0x30] sm:$0xff]
          %v1957 = vld [vmem:[#allocation2 + $0x38] sm:$0xff]
          %v1958 = vld [vmem:[#allocation2 + $0x40] sm:$0xff]
          %v1959 = vld [vmem:[#allocation2 + $0x48] sm:$0xff]
          %v1960 = vld [vmem:[#allocation2 + $0x50] sm:$0xff]
          %v1961 = vld [vmem:[#allocation2 + $0x58] sm:$0xff]
          %v1962 = vld [vmem:[#allocation2 + $0x60] sm:$0xff]
          %v1963 = vld [vmem:[#allocation2 + $0x68] sm:$0xff]
          %v1964 = vld [vmem:[#allocation2 + $0x70] sm:$0xff]
          %v1965 = vld [vmem:[#allocation2 + $0x78] sm:$0xff]
          %v1966 = vld [vmem:[#allocation2 + $0x80] sm:$0xff]
          %v1967 = vld [vmem:[#allocation2 + $0x88] sm:$0xff]
          %v1968 = vld [vmem:[#allocation2 + $0x90] sm:$0xff]
          %v1969 = vld [vmem:[#allocation2 + $0x98] sm:$0xff]
          %v1970 = vld [vmem:[#allocation2 + $0xa0] sm:$0xff]
          %v1971 = vld [vmem:[#allocation2 + $0xa8] sm:$0xff]
          %v1972 = vld [vmem:[#allocation2 + $0xb0] sm:$0xff]
          %v1973 = vld [vmem:[#allocation2 + $0xb8] sm:$0xff]
          %v1974 = vld [vmem:[#allocation2 + $0xc0] sm:$0xff]
          %v1975 = vld [vmem:[#allocation2 + $0xc8] sm:$0xff]
          %v1976 = vld [vmem:[#allocation2 + $0xd0] sm:$0xff]
          %v1977 = vld [vmem:[#allocation2 + $0xd8] sm:$0xff]
          %v1978 = vld [vmem:[#allocation2 + $0xe0] sm:$0xff]
          %v1979 = vld [vmem:[#allocation2 + $0xe8] sm:$0xff]
          %v1980 = vld [vmem:[#allocation2 + $0xf0] sm:$0xff]
          %v1981 = vld [vmem:[#allocation2 + $0xf8] sm:$0xff]
          %v1982 = vld [vmem:[#allocation2 + $0x100] sm:$0xff]
          %v1983 = vld [vmem:[#allocation2 + $0x108] sm:$0xff]
          %v1984 = vld [vmem:[#allocation2 + $0x110] sm:$0xff]
          %v1985 = vld [vmem:[#allocation2 + $0x118] sm:$0xff]
          %v1986 = vld [vmem:[#allocation2 + $0x120] sm:$0xff]
          %v1987 = vld [vmem:[#allocation2 + $0x128] sm:$0xff]
          %v1988 = vld [vmem:[#allocation2 + $0x130] sm:$0xff]
          %v1989 = vld [vmem:[#allocation2 + $0x138] sm:$0xff]
          %v1990 = vld [vmem:[#allocation2 + $0x140] sm:$0xff]
          %v1991 = vld [vmem:[#allocation2 + $0x148] sm:$0xff]
          %v1992 = vld [vmem:[#allocation2 + $0x150] sm:$0xff]
          %v1993 = vld [vmem:[#allocation2 + $0x158] sm:$0xff]
          %v1994 = vld [vmem:[#allocation2 + $0x160] sm:$0xff]
          %v1995 = vld [vmem:[#allocation2 + $0x168] sm:$0xff]
          %v1996 = vld [vmem:[#allocation2 + $0x170] sm:$0xff]
          %v1997 = vld [vmem:[#allocation2 + $0x178] sm:$0xff]
          %v1998 = vld [vmem:[#allocation2 + $0x180] sm:$0xff]
          %v1999 = vld [vmem:[#allocation2 + $0x188] sm:$0xff]
          %v2000 = vld [vmem:[#allocation2 + $0x190] sm:$0xff]
          %v2001 = vld [vmem:[#allocation2 + $0x198] sm:$0xff]
          %v2002 = vld [vmem:[#allocation2 + $0x1a0] sm:$0xff]
          %v2003 = vld [vmem:[#allocation2 + $0x1a8] sm:$0xff]
          %v2004 = vld [vmem:[#allocation2 + $0x1b0] sm:$0xff]
          %v2005 = vld [vmem:[#allocation2 + $0x1b8] sm:$0xff]
          %v2006 = vld [vmem:[#allocation2 + $0x1c0] sm:$0xff]
          %v2007 = vld [vmem:[#allocation2 + $0x1c8] sm:$0xff]
          %v2008 = vld [vmem:[#allocation2 + $0x1d0] sm:$0xff]
          %v2009 = vld [vmem:[#allocation2 + $0x1d8] sm:$0xff]
          %v2010 = vld [vmem:[#allocation2 + $0x1e0] sm:$0xff]
          %v2011 = vld [vmem:[#allocation2 + $0x1e8] sm:$0xff]
          %v2012 = vld [vmem:[#allocation2 + $0x1f0] sm:$0xff]
          %v2013 = vld [vmem:[#allocation2 + $0x1f8] sm:$0xff]
          %v2014 = vld [vmem:[%s271] sm:$0xf]
          %v2016 = vlaneseq
          %v2017 = vshrl.u32 %v2016, 7
          %v2018 = vsub.s32 0, %v2017
          %v2019 = vrot.slane %v2014, %v2018
          %v2020 = vlaneseq
          %v2021 = vshrl.u32 %v2020, 7
          %v2022 = vsub.s32 1, %v2021
          %v2023 = vrot.slane %v2014, %v2022
          %v2024 = vlaneseq
          %v2025 = vshrl.u32 %v2024, 7
          %v2026 = vsub.s32 2, %v2025
          %v2027 = vrot.slane %v2014, %v2026
          %v2028 = vlaneseq
          %v2029 = vshrl.u32 %v2028, 7
          %v2030 = vsub.s32 3, %v2029
          %v2031 = vrot.slane %v2014, %v2030
          %v2036 = vadd.f32 %v1950, %v2019
          %v2037 = vadd.f32 %v1951, %v2023
          %v2038 = vadd.f32 %v1952, %v2027
          %v2039 = vadd.f32 %v1953, %v2031
          %v2040 = vadd.f32 %v1954, %v2019
          %v2041 = vadd.f32 %v1955, %v2023
          %v2042 = vadd.f32 %v1956, %v2027
          %v2043 = vadd.f32 %v1957, %v2031
          %v2044 = vadd.f32 %v1958, %v2019
          %v2045 = vadd.f32 %v1959, %v2023
          %v2046 = vadd.f32 %v1960, %v2027
          %v2047 = vadd.f32 %v1961, %v2031
          %v2048 = vadd.f32 %v1962, %v2019
          %v2049 = vadd.f32 %v1963, %v2023
          %v2050 = vadd.f32 %v1964, %v2027
          %v2051 = vadd.f32 %v1965, %v2031
          %v2052 = vadd.f32 %v1966, %v2019
          %v2053 = vadd.f32 %v1967, %v2023
          %v2054 = vadd.f32 %v1968, %v2027
          %v2055 = vadd.f32 %v1969, %v2031
          %v2056 = vadd.f32 %v1970, %v2019
          %v2057 = vadd.f32 %v1971, %v2023
          %v2058 = vadd.f32 %v1972, %v2027
          %v2059 = vadd.f32 %v1973, %v2031
          %v2060 = vadd.f32 %v1974, %v2019
          %v2061 = vadd.f32 %v1975, %v2023
          %v2062 = vadd.f32 %v1976, %v2027
          %v2063 = vadd.f32 %v1977, %v2031
          %v2064 = vadd.f32 %v1978, %v2019
          %v2065 = vadd.f32 %v1979, %v2023
          %v2066 = vadd.f32 %v1980, %v2027
          %v2067 = vadd.f32 %v1981, %v2031
          %v2068 = vadd.f32 %v1982, %v2019
          %v2069 = vadd.f32 %v1983, %v2023
          %v2070 = vadd.f32 %v1984, %v2027
          %v2071 = vadd.f32 %v1985, %v2031
          %v2072 = vadd.f32 %v1986, %v2019
          %v2073 = vadd.f32 %v1987, %v2023
          %v2074 = vadd.f32 %v1988, %v2027
          %v2075 = vadd.f32 %v1989, %v2031
          %v2076 = vadd.f32 %v1990, %v2019
          %v2077 = vadd.f32 %v1991, %v2023
          %v2078 = vadd.f32 %v1992, %v2027
          %v2079 = vadd.f32 %v1993, %v2031
          %v2080 = vadd.f32 %v1994, %v2019
          %v2081 = vadd.f32 %v1995, %v2023
          %v2082 = vadd.f32 %v1996, %v2027
          %v2083 = vadd.f32 %v1997, %v2031
          %v2084 = vadd.f32 %v1998, %v2019
          %v2085 = vadd.f32 %v1999, %v2023
          %v2086 = vadd.f32 %v2000, %v2027
          %v2087 = vadd.f32 %v2001, %v2031
          %v2088 = vadd.f32 %v2002, %v2019
          %v2089 = vadd.f32 %v2003, %v2023
          %v2090 = vadd.f32 %v2004, %v2027
          %v2091 = vadd.f32 %v2005, %v2031
          %v2092 = vadd.f32 %v2006, %v2019
          %v2093 = vadd.f32 %v2007, %v2023
          %v2094 = vadd.f32 %v2008, %v2027
          %v2095 = vadd.f32 %v2009, %v2031
          %v2096 = vadd.f32 %v2010, %v2019
          %v2097 = vadd.f32 %v2011, %v2023
          %v2098 = vadd.f32 %v2012, %v2027
          %v2099 = vadd.f32 %v2013, %v2031
          %2100 = vst [vmem:[%s253] sm:$0xff] %v2036
          %2101 = vst [vmem:[%s253 + $0x8] sm:$0xff] %v2037
          %2102 = vst [vmem:[%s253 + $0x10] sm:$0xff] %v2038
          %2103 = vst [vmem:[%s253 + $0x18] sm:$0xff] %v2039
          %2104 = vst [vmem:[%s253 + $0x20] sm:$0xff] %v2040
          %2105 = vst [vmem:[%s253 + $0x28] sm:$0xff] %v2041
          %2106 = vst [vmem:[%s253 + $0x30] sm:$0xff] %v2042
          %2107 = vst [vmem:[%s253 + $0x38] sm:$0xff] %v2043
          %2108 = vst [vmem:[%s253 + $0x40] sm:$0xff] %v2044
          %2109 = vst [vmem:[%s253 + $0x48] sm:$0xff] %v2045
          %2110 = vst [vmem:[%s253 + $0x50] sm:$0xff] %v2046
          %2111 = vst [vmem:[%s253 + $0x58] sm:$0xff] %v2047
          %2112 = vst [vmem:[%s253 + $0x60] sm:$0xff] %v2048
          %2113 = vst [vmem:[%s253 + $0x68] sm:$0xff] %v2049
          %2114 = vst [vmem:[%s253 + $0x70] sm:$0xff] %v2050
          %2115 = vst [vmem:[%s253 + $0x78] sm:$0xff] %v2051
          %2116 = vst [vmem:[%s253 + $0x80] sm:$0xff] %v2052
          %2117 = vst [vmem:[%s253 + $0x88] sm:$0xff] %v2053
          %2118 = vst [vmem:[%s253 + $0x90] sm:$0xff] %v2054
          %2119 = vst [vmem:[%s253 + $0x98] sm:$0xff] %v2055
          %2120 = vst [vmem:[%s253 + $0xa0] sm:$0xff] %v2056
          %2121 = vst [vmem:[%s253 + $0xa8] sm:$0xff] %v2057
          %2122 = vst [vmem:[%s253 + $0xb0] sm:$0xff] %v2058
          %2123 = vst [vmem:[%s253 + $0xb8] sm:$0xff] %v2059
          %2124 = vst [vmem:[%s253 + $0xc0] sm:$0xff] %v2060
          %2125 = vst [vmem:[%s253 + $0xc8] sm:$0xff] %v2061
          %2126 = vst [vmem:[%s253 + $0xd0] sm:$0xff] %v2062
          %2127 = vst [vmem:[%s253 + $0xd8] sm:$0xff] %v2063
          %2128 = vst [vmem:[%s253 + $0xe0] sm:$0xff] %v2064
          %2129 = vst [vmem:[%s253 + $0xe8] sm:$0xff] %v2065
          %2130 = vst [vmem:[%s253 + $0xf0] sm:$0xff] %v2066
          %2131 = vst [vmem:[%s253 + $0xf8] sm:$0xff] %v2067
          %2132 = vst [vmem:[%s253 + $0x100] sm:$0xff] %v2068
          %2133 = vst [vmem:[%s253 + $0x108] sm:$0xff] %v2069
          %2134 = vst [vmem:[%s253 + $0x110] sm:$0xff] %v2070
          %2135 = vst [vmem:[%s253 + $0x118] sm:$0xff] %v2071
          %2136 = vst [vmem:[%s253 + $0x120] sm:$0xff] %v2072
          %2137 = vst [vmem:[%s253 + $0x128] sm:$0xff] %v2073
          %2138 = vst [vmem:[%s253 + $0x130] sm:$0xff] %v2074
          %2139 = vst [vmem:[%s253 + $0x138] sm:$0xff] %v2075
          %2140 = vst [vmem:[%s253 + $0x140] sm:$0xff] %v2076
          %2141 = vst [vmem:[%s253 + $0x148] sm:$0xff] %v2077
          %2142 = vst [vmem:[%s253 + $0x150] sm:$0xff] %v2078
          %2143 = vst [vmem:[%s253 + $0x158] sm:$0xff] %v2079
          %2144 = vst [vmem:[%s253 + $0x160] sm:$0xff] %v2080
          %2145 = vst [vmem:[%s253 + $0x168] sm:$0xff] %v2081
          %2146 = vst [vmem:[%s253 + $0x170] sm:$0xff] %v2082
          %2147 = vst [vmem:[%s253 + $0x178] sm:$0xff] %v2083
          %2148 = vst [vmem:[%s253 + $0x180] sm:$0xff] %v2084
          %2149 = vst [vmem:[%s253 + $0x188] sm:$0xff] %v2085
          %2150 = vst [vmem:[%s253 + $0x190] sm:$0xff] %v2086
          %2151 = vst [vmem:[%s253 + $0x198] sm:$0xff] %v2087
          %2152 = vst [vmem:[%s253 + $0x1a0] sm:$0xff] %v2088
          %2153 = vst [vmem:[%s253 + $0x1a8] sm:$0xff] %v2089
          %2154 = vst [vmem:[%s253 + $0x1b0] sm:$0xff] %v2090
          %2155 = vst [vmem:[%s253 + $0x1b8] sm:$0xff] %v2091
          %2156 = vst [vmem:[%s253 + $0x1c0] sm:$0xff] %v2092
          %2157 = vst [vmem:[%s253 + $0x1c8] sm:$0xff] %v2093
          %2158 = vst [vmem:[%s253 + $0x1d0] sm:$0xff] %v2094
          %2159 = vst [vmem:[%s253 + $0x1d8] sm:$0xff] %v2095
          %2160 = vst [vmem:[%s253 + $0x1e0] sm:$0xff] %v2096
          %2161 = vst [vmem:[%s253 + $0x1e8] sm:$0xff] %v2097
          %2162 = vst [vmem:[%s253 + $0x1f0] sm:$0xff] %v2098
          %2163 = vst [vmem:[%s253 + $0x1f8] sm:$0xff] %v2099
        $region44: #{_w8a8_qkvfc1_forward.3} parent=31 // pred_fallthru
          _
        %s2164 = sand.u32 %s128, 1
        %s2165 = sand.u32 %s128, 1
        %s2166 = smul.addr %s2165, 512
        %s2167 = scalar_lea.vmem [#allocation5], %s2166
        // Predicated region
        $region45: #{_w8a8_qkvfc1_forward.3} parent=31 // pred_check
          %p2168 = pneg %p138
        $region46: #{_w8a8_qkvfc1_forward.3} parent=31 // pred_check_branch
          %2170 = sbr.rel (%p2168) target = $region48
        $region47: #{_w8a8_qkvfc1_forward.3} parent=31 // pred_region
          %s2171 = smul.u32 16, %s22
          %s2172 = smul.u32 4, %s23
          %s2173 = smul.addr %s2171, 8
          %s2174 = sadd.s32 %s2172, %s2173
          %s2175 = smul.addr %s2174, 8
          %s2176 = scalar_lea.vmem %s3, %s2175
          // Predicated region
          $region49: #{_w8a8_qkvfc1_forward.3} parent=47 // pred_check
            _
          $region50: #{_w8a8_qkvfc1_forward.3} parent=47 // pred_check_branch
            %2178 = sbr.rel (0) target = $region52
          $region51: #{_w8a8_qkvfc1_forward.3} parent=47 // pred_region
            // Predicated region
            $region53: #{_w8a8_qkvfc1_forward.3} parent=51 // pred_check
              _
            $region54: #{_w8a8_qkvfc1_forward.3} parent=51 // pred_check_branch
              %2180 = sbr.rel (0) target = $region56
            $region55: #{_w8a8_qkvfc1_forward.3} parent=51 // pred_region
              loop: start=0, step=1, limit=1
              $region57: #{_w8a8_qkvfc1_forward.3} parent=55 // loop_pre_header
                _
              $region58: #{_w8a8_qkvfc1_forward.3} parent=55 // loop_header
                %s2182 = sphi 0, %s2186
                %p2183 = scmp.ge.s32.totalorder %s2182, 1
                %s2187 = sphi %s2167, %s2167
                %s2188 = sphi %s2176, %s2176
              $region59: #{_w8a8_qkvfc1_forward.3} parent=55 // loop_header_branch
                %2185 = sbr.rel (%p2183) target = $region63
              $region60: #{_w8a8_qkvfc1_forward.3} parent=55 // loop_body
                %v2189 = vld [vmem:[%s2187] sm:$0xff]
                %2190 = vst [vmem:[%s2188] sm:$0xff] %v2189
                %v2191 = vld [vmem:[%s2187 + $0x8] sm:$0xff]
                %2192 = vst [vmem:[%s2188 + $0x8] sm:$0xff] %v2191
                %v2193 = vld [vmem:[%s2187 + $0x10] sm:$0xff]
                %2194 = vst [vmem:[%s2188 + $0x10] sm:$0xff] %v2193
                %v2195 = vld [vmem:[%s2187 + $0x18] sm:$0xff]
                %2196 = vst [vmem:[%s2188 + $0x18] sm:$0xff] %v2195
                %v2197 = vld [vmem:[%s2187 + $0x20] sm:$0xff]
                %2198 = vst [vmem:[%s2188 + $0x40] sm:$0xff] %v2197
                %v2199 = vld [vmem:[%s2187 + $0x28] sm:$0xff]
                %2200 = vst [vmem:[%s2188 + $0x48] sm:$0xff] %v2199
                %v2201 = vld [vmem:[%s2187 + $0x30] sm:$0xff]
                %2202 = vst [vmem:[%s2188 + $0x50] sm:$0xff] %v2201
                %v2203 = vld [vmem:[%s2187 + $0x38] sm:$0xff]
                %2204 = vst [vmem:[%s2188 + $0x58] sm:$0xff] %v2203
                %v2205 = vld [vmem:[%s2187 + $0x40] sm:$0xff]
                %2206 = vst [vmem:[%s2188 + $0x80] sm:$0xff] %v2205
                %v2207 = vld [vmem:[%s2187 + $0x48] sm:$0xff]
                %2208 = vst [vmem:[%s2188 + $0x88] sm:$0xff] %v2207
                %v2209 = vld [vmem:[%s2187 + $0x50] sm:$0xff]
                %2210 = vst [vmem:[%s2188 + $0x90] sm:$0xff] %v2209
                %v2211 = vld [vmem:[%s2187 + $0x58] sm:$0xff]
                %2212 = vst [vmem:[%s2188 + $0x98] sm:$0xff] %v2211
                %v2213 = vld [vmem:[%s2187 + $0x60] sm:$0xff]
                %2214 = vst [vmem:[%s2188 + $0xc0] sm:$0xff] %v2213
                %v2215 = vld [vmem:[%s2187 + $0x68] sm:$0xff]
                %2216 = vst [vmem:[%s2188 + $0xc8] sm:$0xff] %v2215
                %v2217 = vld [vmem:[%s2187 + $0x70] sm:$0xff]
                %2218 = vst [vmem:[%s2188 + $0xd0] sm:$0xff] %v2217
                %v2219 = vld [vmem:[%s2187 + $0x78] sm:$0xff]
                %2220 = vst [vmem:[%s2188 + $0xd8] sm:$0xff] %v2219
                %v2221 = vld [vmem:[%s2187 + $0x80] sm:$0xff]
                %2222 = vst [vmem:[%s2188 + $0x100] sm:$0xff] %v2221
                %v2223 = vld [vmem:[%s2187 + $0x88] sm:$0xff]
                %2224 = vst [vmem:[%s2188 + $0x108] sm:$0xff] %v2223
                %v2225 = vld [vmem:[%s2187 + $0x90] sm:$0xff]
                %2226 = vst [vmem:[%s2188 + $0x110] sm:$0xff] %v2225
                %v2227 = vld [vmem:[%s2187 + $0x98] sm:$0xff]
                %2228 = vst [vmem:[%s2188 + $0x118] sm:$0xff] %v2227
                %v2229 = vld [vmem:[%s2187 + $0xa0] sm:$0xff]
                %2230 = vst [vmem:[%s2188 + $0x140] sm:$0xff] %v2229
                %v2231 = vld [vmem:[%s2187 + $0xa8] sm:$0xff]
                %2232 = vst [vmem:[%s2188 + $0x148] sm:$0xff] %v2231
                %v2233 = vld [vmem:[%s2187 + $0xb0] sm:$0xff]
                %2234 = vst [vmem:[%s2188 + $0x150] sm:$0xff] %v2233
                %v2235 = vld [vmem:[%s2187 + $0xb8] sm:$0xff]
                %2236 = vst [vmem:[%s2188 + $0x158] sm:$0xff] %v2235
                %v2237 = vld [vmem:[%s2187 + $0xc0] sm:$0xff]
                %2238 = vst [vmem:[%s2188 + $0x180] sm:$0xff] %v2237
                %v2239 = vld [vmem:[%s2187 + $0xc8] sm:$0xff]
                %2240 = vst [vmem:[%s2188 + $0x188] sm:$0xff] %v2239
                %v2241 = vld [vmem:[%s2187 + $0xd0] sm:$0xff]
                %2242 = vst [vmem:[%s2188 + $0x190] sm:$0xff] %v2241
                %v2243 = vld [vmem:[%s2187 + $0xd8] sm:$0xff]
                %2244 = vst [vmem:[%s2188 + $0x198] sm:$0xff] %v2243
                %v2245 = vld [vmem:[%s2187 + $0xe0] sm:$0xff]
                %2246 = vst [vmem:[%s2188 + $0x1c0] sm:$0xff] %v2245
                %v2247 = vld [vmem:[%s2187 + $0xe8] sm:$0xff]
                %2248 = vst [vmem:[%s2188 + $0x1c8] sm:$0xff] %v2247
                %v2249 = vld [vmem:[%s2187 + $0xf0] sm:$0xff]
                %2250 = vst [vmem:[%s2188 + $0x1d0] sm:$0xff] %v2249
                %v2251 = vld [vmem:[%s2187 + $0xf8] sm:$0xff]
                %2252 = vst [vmem:[%s2188 + $0x1d8] sm:$0xff] %v2251
                %v2253 = vld [vmem:[%s2187 + $0x100] sm:$0xff]
                %2254 = vst [vmem:[%s2188 + $0x200] sm:$0xff] %v2253
                %v2255 = vld [vmem:[%s2187 + $0x108] sm:$0xff]
                %2256 = vst [vmem:[%s2188 + $0x208] sm:$0xff] %v2255
                %v2257 = vld [vmem:[%s2187 + $0x110] sm:$0xff]
                %2258 = vst [vmem:[%s2188 + $0x210] sm:$0xff] %v2257
                %v2259 = vld [vmem:[%s2187 + $0x118] sm:$0xff]
                %2260 = vst [vmem:[%s2188 + $0x218] sm:$0xff] %v2259
                %v2261 = vld [vmem:[%s2187 + $0x120] sm:$0xff]
                %2262 = vst [vmem:[%s2188 + $0x240] sm:$0xff] %v2261
                %v2263 = vld [vmem:[%s2187 + $0x128] sm:$0xff]
                %2264 = vst [vmem:[%s2188 + $0x248] sm:$0xff] %v2263
                %v2265 = vld [vmem:[%s2187 + $0x130] sm:$0xff]
                %2266 = vst [vmem:[%s2188 + $0x250] sm:$0xff] %v2265
                %v2267 = vld [vmem:[%s2187 + $0x138] sm:$0xff]
                %2268 = vst [vmem:[%s2188 + $0x258] sm:$0xff] %v2267
                %v2269 = vld [vmem:[%s2187 + $0x140] sm:$0xff]
                %2270 = vst [vmem:[%s2188 + $0x280] sm:$0xff] %v2269
                %v2271 = vld [vmem:[%s2187 + $0x148] sm:$0xff]
                %2272 = vst [vmem:[%s2188 + $0x288] sm:$0xff] %v2271
                %v2273 = vld [vmem:[%s2187 + $0x150] sm:$0xff]
                %2274 = vst [vmem:[%s2188 + $0x290] sm:$0xff] %v2273
                %v2275 = vld [vmem:[%s2187 + $0x158] sm:$0xff]
                %2276 = vst [vmem:[%s2188 + $0x298] sm:$0xff] %v2275
                %v2277 = vld [vmem:[%s2187 + $0x160] sm:$0xff]
                %2278 = vst [vmem:[%s2188 + $0x2c0] sm:$0xff] %v2277
                %v2279 = vld [vmem:[%s2187 + $0x168] sm:$0xff]
                %2280 = vst [vmem:[%s2188 + $0x2c8] sm:$0xff] %v2279
                %v2281 = vld [vmem:[%s2187 + $0x170] sm:$0xff]
                %2282 = vst [vmem:[%s2188 + $0x2d0] sm:$0xff] %v2281
                %v2283 = vld [vmem:[%s2187 + $0x178] sm:$0xff]
                %2284 = vst [vmem:[%s2188 + $0x2d8] sm:$0xff] %v2283
                %v2285 = vld [vmem:[%s2187 + $0x180] sm:$0xff]
                %2286 = vst [vmem:[%s2188 + $0x300] sm:$0xff] %v2285
                %v2287 = vld [vmem:[%s2187 + $0x188] sm:$0xff]
                %2288 = vst [vmem:[%s2188 + $0x308] sm:$0xff] %v2287
                %v2289 = vld [vmem:[%s2187 + $0x190] sm:$0xff]
                %2290 = vst [vmem:[%s2188 + $0x310] sm:$0xff] %v2289
                %v2291 = vld [vmem:[%s2187 + $0x198] sm:$0xff]
                %2292 = vst [vmem:[%s2188 + $0x318] sm:$0xff] %v2291
                %v2293 = vld [vmem:[%s2187 + $0x1a0] sm:$0xff]
                %2294 = vst [vmem:[%s2188 + $0x340] sm:$0xff] %v2293
                %v2295 = vld [vmem:[%s2187 + $0x1a8] sm:$0xff]
                %2296 = vst [vmem:[%s2188 + $0x348] sm:$0xff] %v2295
                %v2297 = vld [vmem:[%s2187 + $0x1b0] sm:$0xff]
                %2298 = vst [vmem:[%s2188 + $0x350] sm:$0xff] %v2297
                %v2299 = vld [vmem:[%s2187 + $0x1b8] sm:$0xff]
                %2300 = vst [vmem:[%s2188 + $0x358] sm:$0xff] %v2299
                %v2301 = vld [vmem:[%s2187 + $0x1c0] sm:$0xff]
                %2302 = vst [vmem:[%s2188 + $0x380] sm:$0xff] %v2301
                %v2303 = vld [vmem:[%s2187 + $0x1c8] sm:$0xff]
                %2304 = vst [vmem:[%s2188 + $0x388] sm:$0xff] %v2303
                %v2305 = vld [vmem:[%s2187 + $0x1d0] sm:$0xff]
                %2306 = vst [vmem:[%s2188 + $0x390] sm:$0xff] %v2305
                %v2307 = vld [vmem:[%s2187 + $0x1d8] sm:$0xff]
                %2308 = vst [vmem:[%s2188 + $0x398] sm:$0xff] %v2307
                %v2309 = vld [vmem:[%s2187 + $0x1e0] sm:$0xff]
                %2310 = vst [vmem:[%s2188 + $0x3c0] sm:$0xff] %v2309
                %v2311 = vld [vmem:[%s2187 + $0x1e8] sm:$0xff]
                %2312 = vst [vmem:[%s2188 + $0x3c8] sm:$0xff] %v2311
                %v2313 = vld [vmem:[%s2187 + $0x1f0] sm:$0xff]
                %2314 = vst [vmem:[%s2188 + $0x3d0] sm:$0xff] %v2313
                %v2315 = vld [vmem:[%s2187 + $0x1f8] sm:$0xff]
                %2316 = vst [vmem:[%s2188 + $0x3d8] sm:$0xff] %v2315
              $region61: #{_w8a8_qkvfc1_forward.3} parent=55 // loop_footer
                %s2186 = sadd.s32 1, %s2182
              $region62: #{_w8a8_qkvfc1_forward.3} parent=55 // loop_footer_branch
                %2181 = sbr.rel target = $region58
              $region63: #{_w8a8_qkvfc1_forward.3} parent=55 // loop_exit
                _
            $region56: #{_w8a8_qkvfc1_forward.3} parent=51 // pred_fallthru
              _
            // Predicated region
            $region64: #{_w8a8_qkvfc1_forward.3} parent=51 // pred_check
              _
            $region65: #{_w8a8_qkvfc1_forward.3} parent=51 // pred_check_branch
              %2318 = sbr.rel target = $region67
            $region66: #{_w8a8_qkvfc1_forward.3} parent=51 // pred_region
              _
            $region67: #{_w8a8_qkvfc1_forward.3} parent=51 // pred_fallthru
              _
          $region52: #{_w8a8_qkvfc1_forward.3} parent=47 // pred_fallthru
            _
          %2319 = vnop
        $region48: #{_w8a8_qkvfc1_forward.3} parent=31 // pred_fallthru
          _
      $region32: #{_w8a8_qkvfc1_forward.3} parent=5 // pred_fallthru
        _
      %p2320 = scmp.le.s32.totalorder 2, %s12
      // Predicated region
      $region68: #{_w8a8_qkvfc1_forward.3} parent=5 // pred_check
        %p2321 = pneg %p2320
      $region69: #{_w8a8_qkvfc1_forward.3} parent=5 // pred_check_branch
        %2323 = sbr.rel (%p2321) target = $region71
      $region70: #{_w8a8_qkvfc1_forward.3} parent=5 // pred_region
        %s2324 = ssub.s32 %s12, 2
        // Predicated region
        $region72: #{_w8a8_qkvfc1_forward.3} parent=70 // pred_check
          %p2325 = pneg %p144
        $region73: #{_w8a8_qkvfc1_forward.3} parent=70 // pred_check_branch
          %2327 = sbr.rel (%p2325) target = $region75
        $region74: #{_w8a8_qkvfc1_forward.3} parent=70 // pred_region
          %s2328 = sand.u32 %s129, 1
          %s2329 = sand.u32 %s129, 1
          %s2330 = smul.addr %s2329, 512
          %s2331 = scalar_lea.vmem [#allocation5], %s2330
        $region75: #{_w8a8_qkvfc1_forward.3} parent=70 // pred_fallthru
          _
      $region71: #{_w8a8_qkvfc1_forward.3} parent=5 // pred_fallthru
        _
    $region6: #{_w8a8_qkvfc1_forward.3} parent=1 // loop_footer
      %s16 = sadd.s32 1, %s12
    $region7: #{_w8a8_qkvfc1_forward.3} parent=1 // loop_footer_branch
      %11 = sbr.rel target = $region3
    $region8: #{_w8a8_qkvfc1_forward.3} parent=1 // loop_exit
      _
    %2332 = vsyncpa [#allocation4], 1
    %s2333 = scalar_lea.sflag [#allocation4], 1
    %2334 = vsyncpa %s2333, 1

</llo_original>
